<compile_context>
chip_gen: v7x
topology: tpu7x:2x2x1
jax: 0.10.0
libtpu: 0.0.40
codegen_flags: <defaults>
</compile_context>

<pallas_src>
import jax
import jax.numpy as jnp
from jax import lax
from jax.experimental import pallas as pl
from jax.experimental.pallas import tpu as pltpu

VMEM_SPEC = pl.BlockSpec(memory_space=pltpu.MemorySpace.VMEM)


# ----------------------------------------------------------------------------
# Fused forward kernel.
# ques_ref is seq-major: (T, B, V).  Matmul weights are bf16, biases f32.
# ----------------------------------------------------------------------------
def _deeper_lstm_kernel(img_ref, ques_ref,
                        w_img_ref, b_img_ref, w_emb_ref, b_emb_ref,
                        wih0_ref, whh0_ref, b0_ref,
                        wih1_ref, whh1_ref, b1_ref,
                        w_fc_ref, b_fc_ref, w_mlp_ref, b_mlp_ref,
                        o_ref):
    T, B, V = ques_ref.shape
    H = whh0_ref.shape[0]
    f32 = jnp.float32
    bf16 = jnp.bfloat16

    def mm(a, w):
        # bf16 x bf16 MXU matmul with f32 accumulation.
        return jnp.dot(a.astype(bf16), w, preferred_element_type=f32)

    # ---- image branch: tanh(img @ W_img + b_img) ---------------------------
    img_feat = jnp.tanh(mm(img_ref[...], w_img_ref[...]) + b_img_ref[...])

    # ---- question embedding, all timesteps at once (Dropout = identity) ----
    q_flat = ques_ref[...].reshape(T * B, V)                       # seq-major rows
    emb = jnp.tanh(mm(q_flat, w_emb_ref[...]) + b_emb_ref[...])    # (T*B, E) f32

    # ---- layer-0 input projection hoisted out of the recurrence ------------
    # One big (T*B, E) @ (E, 4H) matmul; gate order (i, f, g, o) along 4H.
    xproj = mm(emb, wih0_ref[...]) + b0_ref[...]                   # (T*B, 4H) f32

    # Hoist weight / bias loads out of the unrolled loop.
    whh0 = whh0_ref[...]
    wih1 = wih1_ref[...]
    whh1 = whh1_ref[...]
    b1 = b1_ref[...]

    def lstm_gates(pre, c_prev):
        i_g = jax.nn.sigmoid(pre[:, 0 * H:1 * H])
        f_g = jax.nn.sigmoid(pre[:, 1 * H:2 * H])
        g_g = jnp.tanh(pre[:, 2 * H:3 * H])
        o_g = jax.nn.sigmoid(pre[:, 3 * H:4 * H])
        c_new = f_g * c_prev + i_g * g_g
        h_new = o_g * jnp.tanh(c_new)
        return h_new, c_new

    z = jnp.zeros((B, H), f32)
    h0, c0, h1, c1 = z, z, z, z
    # Fully unrolled recurrence (T static & small): lets the scheduler overlap
    # step t's VPU/EUP gate math with step t+1's recurrent matmuls.
    for t in range(T):
        pre0 = xproj[t * B:(t + 1) * B, :] + mm(h0, whh0)
        h0, c0 = lstm_gates(pre0, c0)
        pre1 = mm(h0, wih1) + mm(h1, whh1) + b1
        h1, c1 = lstm_gates(pre1, c1)

    # ---- head: tanh([h0|h1] @ W_fc + b_fc) * img_feat -> mlp ---------------
    # Split-K form of concat([h0,h1]) @ W_fc (avoids an in-kernel concat).
    w_fc = w_fc_ref[...]
    x = mm(h0, w_fc[:H, :]) + mm(h1, w_fc[H:, :]) + b_fc_ref[...]
    x = jnp.tanh(x) * img_feat
    y = mm(x, w_mlp_ref[...]) + b_mlp_ref[...]
    o_ref[...] = y.astype(o_ref.dtype)


def deeper_lstm_forward(img, ques, p):
    """img: (B, image_dim) f32; ques: (B, T, vocab) f32 -> (B, output_dim) f32."""
    B = img.shape[0]
    out_dim = p["w_mlp"].shape[1]
    B_pad = max(8, ((B + 7) // 8) * 8)            # pad batch to a sublane tile

    ques_seq = jnp.transpose(ques, (1, 0, 2))     # (T, B, V): seq-major for LSTM
    if B_pad != B:
        img = jnp.pad(img, ((0, B_pad - B), (0, 0)))
        ques_seq = jnp.pad(ques_seq, ((0, 0), (0, B_pad - B), (0, 0)))

    out = pl.pallas_call(
        _deeper_lstm_kernel,
        out_shape=jax.ShapeDtypeStruct((B_pad, out_dim), jnp.float32),
        in_specs=[VMEM_SPEC] * 16,
        out_specs=VMEM_SPEC,
        # Gridless: everything (a few hundred KiB) is VMEM-resident on
        # v5e/v6e/v7x.  For production sizes add a batch-"parallel" grid axis
        # (v7x dual-TC) and tile the large embedding weights with BlockSpecs.
    )(img, ques_seq,
      p["w_img"], p["b_img"], p["w_emb"], p["b_emb"],
      p["wih0"], p["whh0"], p["b0"],
      p["wih1"], p["whh1"], p["b1"],
      p["w_fc"], p["b_fc"], p["w_mlp"], p["b_mlp"])
    return out[:B]


# ----------------------------------------------------------------------------
# Pure-JAX reference mirroring the module semantics (and the kernel's bf16
# matmul-operand / f32-accumulation numerics).
# ----------------------------------------------------------------------------
def reference_forward(img, ques, p):
    def bdot(a, w):
        return jnp.dot(a.astype(jnp.bfloat16), w, preferred_element_type=jnp.float32)

    B, T, V = ques.shape
    H = p["whh0"].shape[0]

    img_feat = jnp.tanh(bdot(img, p["w_img"]) + p["b_img"])
    emb = jnp.tanh(bdot(ques.reshape(B * T, V), p["w_emb"]) + p["b_emb"])
    emb = emb.reshape(B, T, -1).transpose(1, 0, 2)          # (T, B, E)

    def gates(pre, c_prev):
        i_g = jax.nn.sigmoid(pre[:, 0 * H:1 * H])
        f_g = jax.nn.sigmoid(pre[:, 1 * H:2 * H])
        g_g = jnp.tanh(pre[:, 2 * H:3 * H])
        o_g = jax.nn.sigmoid(pre[:, 3 * H:4 * H])
        c_new = f_g * c_prev + i_g * g_g
        return o_g * jnp.tanh(c_new), c_new

    def scan_fn(carry, x_t):
        h0, c0, h1, c1 = carry
        pre0 = bdot(x_t, p["wih0"]) + p["b0"] + bdot(h0, p["whh0"])
        h0, c0 = gates(pre0, c0)
        pre1 = bdot(h0, p["wih1"]) + bdot(h1, p["whh1"]) + p["b1"]
        h1, c1 = gates(pre1, c1)
        return (h0, c0, h1, c1), None

    z = jnp.zeros((B, H), jnp.float32)
    (h0, _, h1, _), _ = lax.scan(scan_fn, (z, z, z, z), emb)

    x = bdot(h0, p["w_fc"][:H]) + bdot(h1, p["w_fc"][H:]) + p["b_fc"]
    x = jnp.tanh(x) * img_feat
    return bdot(x, p["w_mlp"]) + p["b_mlp"]


# ----------------------------------------------------------------------------
# Deterministic parameter init.  Matmul weights in bf16, biases in f32.
# LSTM weights are gate-fused: (in, 4H), gate order (i, f, g, o); the bias is
# the folded b_ih + b_hh, shape (1, 4H).
# ----------------------------------------------------------------------------
def init_params(key, vocab, embed, image_dim, image_embed, hidden,
                rnn_out, out_dim):
    ks = jax.random.split(key, 14)

    def w(k, shape, fan_in, dtype=jnp.bfloat16):
        return (jax.random.normal(k, shape, jnp.float32)
                * (1.0 / jnp.sqrt(fan_in))).astype(dtype)

    H4 = 4 * hidden
    return dict(
        w_img=w(ks[0], (image_dim, image_embed), image_dim),
        b_img=w(ks[1], (1, image_embed), image_dim, jnp.float32),
        w_emb=w(ks[2], (vocab, embed), vocab),
        b_emb=w(ks[3], (1, embed), vocab, jnp.float32),
        wih0=w(ks[4], (embed, H4), embed),
        whh0=w(ks[5], (hidden, H4), hidden),
        b0=w(ks[6], (1, H4), hidden, jnp.float32),
        wih1=w(ks[7], (hidden, H4), hidden),
        whh1=w(ks[8], (hidden, H4), hidden),
        b1=w(ks[9], (1, H4), hidden, jnp.float32),
        w_fc=w(ks[10], (2 * hidden, rnn_out), 2 * hidden),
        b_fc=w(ks[11], (1, rnn_out), 2 * hidden, jnp.float32),
        w_mlp=w(ks[12], (rnn_out, out_dim), rnn_out),
        b_mlp=w(ks[13], (1, out_dim), rnn_out, jnp.float32),
    )


if __name__ == "__main__":
    # Small, lane-friendly shapes consistent with the module
    # (image_embed_dim == rnn_output_dim is required by the elementwise mul;
    #  4*HIDDEN == 128 makes the gate-fused matmuls exactly one lane width).
    B, T = 2, 8
    VOCAB, EMBED = 128, 32
    IMAGE_DIM, IMAGE_EMBED = 128, 128
    HIDDEN, RNN_OUT, OUT_DIM = 32, 128, 128

    key = jax.random.PRNGKey(0)
    k_img, k_q, k_p = jax.random.split(key, 3)
    img = jax.random.normal(k_img, (B, IMAGE_DIM), jnp.float32)
    ques = jax.random.normal(k_q, (B, T, VOCAB), jnp.float32)
    params = init_params(k_p, VOCAB, EMBED, IMAGE_DIM, IMAGE_EMBED,
                         HIDDEN, RNN_OUT, OUT_DIM)

    fwd = jax.jit(deeper_lstm_forward)
    out = jax.block_until_ready(fwd(img, ques, params))
    ref = jax.block_until_ready(reference_forward(img, ques, params))

    assert out.shape == (B, OUT_DIM), out.shape
    assert jnp.allclose(out, ref, atol=1e-3, rtol=1e-3), (
        "mismatch vs reference: max abs err = %e"
        % float(jnp.max(jnp.abs(out - ref))))

    print("KERNEL_OK")
</pallas_src>

<mosaic_0001>
module attributes {stable_mosaic.version = 11 : i64} {
  func.func @_deeper_lstm_kernel(%arg0: memref<8x128xf32, #tpu.memory_space<vmem>>, %arg1: memref<8x8x128xf32, #tpu.memory_space<vmem>>, %arg2: memref<128x128xbf16, #tpu.memory_space<vmem>>, %arg3: memref<1x128xf32, #tpu.memory_space<vmem>>, %arg4: memref<128x32xbf16, #tpu.memory_space<vmem>>, %arg5: memref<1x32xf32, #tpu.memory_space<vmem>>, %arg6: memref<32x128xbf16, #tpu.memory_space<vmem>>, %arg7: memref<32x128xbf16, #tpu.memory_space<vmem>>, %arg8: memref<1x128xf32, #tpu.memory_space<vmem>>, %arg9: memref<32x128xbf16, #tpu.memory_space<vmem>>, %arg10: memref<32x128xbf16, #tpu.memory_space<vmem>>, %arg11: memref<1x128xf32, #tpu.memory_space<vmem>>, %arg12: memref<64x128xbf16, #tpu.memory_space<vmem>>, %arg13: memref<1x128xf32, #tpu.memory_space<vmem>>, %arg14: memref<128x128xbf16, #tpu.memory_space<vmem>>, %arg15: memref<1x128xf32, #tpu.memory_space<vmem>>, %arg16: memref<8x128xf32, #tpu.memory_space<vmem>>) attributes {dimension_semantics = [], scalar_prefetch = 0 : i64, scratch_operands = 0 : i64, tpu.core_type = #tpu.core_type<tc>} {
    %c0 = arith.constant 0 : index
    %c0_0 = arith.constant 0 : index
    %0 = vector.load %arg0[%c0, %c0_0] : memref<8x128xf32, #tpu.memory_space<vmem>>, vector<8x128xf32>
    %c0_1 = arith.constant 0 : index
    %c0_2 = arith.constant 0 : index
    %1 = vector.load %arg2[%c0_1, %c0_2] : memref<128x128xbf16, #tpu.memory_space<vmem>>, vector<128x128xbf16>
    %2 = arith.truncf %0 : vector<8x128xf32> to vector<8x128xbf16>
    %cst = arith.constant dense<0.000000e+00> : vector<8x128xf32>
    %3 = tpu.matmul %2, %1, %cst {dimension_numbers = #tpu.dot_dimension_numbers<[1], [0], [0], [1], [0, 0, 1, 1], [], []>} : vector<8x128xbf16>, vector<128x128xbf16>, vector<8x128xf32> -> vector<8x128xf32>
    %c0_3 = arith.constant 0 : index
    %c0_4 = arith.constant 0 : index
    %4 = vector.load %arg3[%c0_3, %c0_4] : memref<1x128xf32, #tpu.memory_space<vmem>>, vector<1x128xf32>
    %5 = vector.broadcast %4 : vector<1x128xf32> to vector<8x128xf32>
    %6 = arith.addf %3, %5 : vector<8x128xf32>
    %7 = math.tanh %6 : vector<8x128xf32>
    %c0_5 = arith.constant 0 : index
    %c0_6 = arith.constant 0 : index
    %c0_7 = arith.constant 0 : index
    %8 = vector.load %arg1[%c0_5, %c0_6, %c0_7] : memref<8x8x128xf32, #tpu.memory_space<vmem>>, vector<8x8x128xf32>
    %9 = vector.shape_cast %8 : vector<8x8x128xf32> to vector<64x128xf32>
    %c0_8 = arith.constant 0 : index
    %c0_9 = arith.constant 0 : index
    %10 = vector.load %arg4[%c0_8, %c0_9] : memref<128x32xbf16, #tpu.memory_space<vmem>>, vector<128x32xbf16>
    %11 = arith.truncf %9 : vector<64x128xf32> to vector<64x128xbf16>
    %cst_10 = arith.constant dense<0.000000e+00> : vector<64x32xf32>
    %12 = tpu.matmul %11, %10, %cst_10 {dimension_numbers = #tpu.dot_dimension_numbers<[1], [0], [0], [1], [0, 0, 1, 1], [], []>} : vector<64x128xbf16>, vector<128x32xbf16>, vector<64x32xf32> -> vector<64x32xf32>
    %c0_11 = arith.constant 0 : index
    %c0_12 = arith.constant 0 : index
    %13 = vector.load %arg5[%c0_11, %c0_12] : memref<1x32xf32, #tpu.memory_space<vmem>>, vector<1x32xf32>
    %14 = vector.broadcast %13 : vector<1x32xf32> to vector<64x32xf32>
    %15 = arith.addf %12, %14 : vector<64x32xf32>
    %16 = math.tanh %15 : vector<64x32xf32>
    %c0_13 = arith.constant 0 : index
    %c0_14 = arith.constant 0 : index
    %17 = vector.load %arg6[%c0_13, %c0_14] : memref<32x128xbf16, #tpu.memory_space<vmem>>, vector<32x128xbf16>
    %18 = arith.truncf %16 : vector<64x32xf32> to vector<64x32xbf16>
    %cst_15 = arith.constant dense<0.000000e+00> : vector<64x128xf32>
    %19 = tpu.matmul %18, %17, %cst_15 {dimension_numbers = #tpu.dot_dimension_numbers<[1], [0], [0], [1], [0, 0, 1, 1], [], []>} : vector<64x32xbf16>, vector<32x128xbf16>, vector<64x128xf32> -> vector<64x128xf32>
    %c0_16 = arith.constant 0 : index
    %c0_17 = arith.constant 0 : index
    %20 = vector.load %arg8[%c0_16, %c0_17] : memref<1x128xf32, #tpu.memory_space<vmem>>, vector<1x128xf32>
    %21 = vector.broadcast %20 : vector<1x128xf32> to vector<64x128xf32>
    %22 = arith.addf %19, %21 : vector<64x128xf32>
    %c0_18 = arith.constant 0 : index
    %c0_19 = arith.constant 0 : index
    %23 = vector.load %arg7[%c0_18, %c0_19] : memref<32x128xbf16, #tpu.memory_space<vmem>>, vector<32x128xbf16>
    %c0_20 = arith.constant 0 : index
    %c0_21 = arith.constant 0 : index
    %24 = vector.load %arg9[%c0_20, %c0_21] : memref<32x128xbf16, #tpu.memory_space<vmem>>, vector<32x128xbf16>
    %c0_22 = arith.constant 0 : index
    %c0_23 = arith.constant 0 : index
    %25 = vector.load %arg10[%c0_22, %c0_23] : memref<32x128xbf16, #tpu.memory_space<vmem>>, vector<32x128xbf16>
    %c0_24 = arith.constant 0 : index
    %c0_25 = arith.constant 0 : index
    %26 = vector.load %arg11[%c0_24, %c0_25] : memref<1x128xf32, #tpu.memory_space<vmem>>, vector<1x128xf32>
    %cst_26 = arith.constant 0.000000e+00 : f32
    %27 = vector.broadcast %cst_26 : f32 to vector<8x32xf32>
    %28 = vector.extract_strided_slice %22 {offsets = [0, 0], sizes = [8, 128], strides = [1, 1]} : vector<64x128xf32> to vector<8x128xf32>
    %29 = arith.truncf %27 : vector<8x32xf32> to vector<8x32xbf16>
    %cst_27 = arith.constant dense<0.000000e+00> : vector<8x128xf32>
    %30 = tpu.matmul %29, %23, %cst_27 {dimension_numbers = #tpu.dot_dimension_numbers<[1], [0], [0], [1], [0, 0, 1, 1], [], []>} : vector<8x32xbf16>, vector<32x128xbf16>, vector<8x128xf32> -> vector<8x128xf32>
    %31 = arith.addf %28, %30 : vector<8x128xf32>
    %32 = vector.extract_strided_slice %31 {offsets = [0, 0], sizes = [8, 32], strides = [1, 1]} : vector<8x128xf32> to vector<8x32xf32>
    %33 = arith.negf %32 : vector<8x32xf32>
    %34 = math.exp %33 : vector<8x32xf32>
    %cst_28 = arith.constant 1.000000e+00 : f32
    %35 = vector.broadcast %cst_28 : f32 to vector<8x32xf32>
    %36 = arith.addf %35, %34 : vector<8x32xf32>
    %37 = arith.divf %35, %36 : vector<8x32xf32>
    %38 = vector.extract_strided_slice %31 {offsets = [0, 32], sizes = [8, 32], strides = [1, 1]} : vector<8x128xf32> to vector<8x32xf32>
    %39 = arith.negf %38 : vector<8x32xf32>
    %40 = math.exp %39 : vector<8x32xf32>
    %cst_29 = arith.constant 1.000000e+00 : f32
    %41 = vector.broadcast %cst_29 : f32 to vector<8x32xf32>
    %42 = arith.addf %41, %40 : vector<8x32xf32>
    %43 = arith.divf %41, %42 : vector<8x32xf32>
    %44 = vector.extract_strided_slice %31 {offsets = [0, 64], sizes = [8, 32], strides = [1, 1]} : vector<8x128xf32> to vector<8x32xf32>
    %45 = math.tanh %44 : vector<8x32xf32>
    %46 = vector.extract_strided_slice %31 {offsets = [0, 96], sizes = [8, 32], strides = [1, 1]} : vector<8x128xf32> to vector<8x32xf32>
    %47 = arith.negf %46 : vector<8x32xf32>
    %48 = math.exp %47 : vector<8x32xf32>
    %cst_30 = arith.constant 1.000000e+00 : f32
    %49 = vector.broadcast %cst_30 : f32 to vector<8x32xf32>
    %50 = arith.addf %49, %48 : vector<8x32xf32>
    %51 = arith.divf %49, %50 : vector<8x32xf32>
    %52 = arith.mulf %43, %27 : vector<8x32xf32>
    %53 = arith.mulf %37, %45 : vector<8x32xf32>
    %54 = arith.addf %52, %53 : vector<8x32xf32>
    %55 = math.tanh %54 : vector<8x32xf32>
    %56 = arith.mulf %51, %55 : vector<8x32xf32>
    %57 = arith.truncf %56 : vector<8x32xf32> to vector<8x32xbf16>
    %cst_31 = arith.constant dense<0.000000e+00> : vector<8x128xf32>
    %58 = tpu.matmul %57, %24, %cst_31 {dimension_numbers = #tpu.dot_dimension_numbers<[1], [0], [0], [1], [0, 0, 1, 1], [], []>} : vector<8x32xbf16>, vector<32x128xbf16>, vector<8x128xf32> -> vector<8x128xf32>
    %59 = arith.truncf %27 : vector<8x32xf32> to vector<8x32xbf16>
    %cst_32 = arith.constant dense<0.000000e+00> : vector<8x128xf32>
    %60 = tpu.matmul %59, %25, %cst_32 {dimension_numbers = #tpu.dot_dimension_numbers<[1], [0], [0], [1], [0, 0, 1, 1], [], []>} : vector<8x32xbf16>, vector<32x128xbf16>, vector<8x128xf32> -> vector<8x128xf32>
    %61 = arith.addf %58, %60 : vector<8x128xf32>
    %62 = vector.broadcast %26 : vector<1x128xf32> to vector<8x128xf32>
    %63 = arith.addf %61, %62 : vector<8x128xf32>
    %64 = vector.extract_strided_slice %63 {offsets = [0, 0], sizes = [8, 32], strides = [1, 1]} : vector<8x128xf32> to vector<8x32xf32>
    %65 = arith.negf %64 : vector<8x32xf32>
    %66 = math.exp %65 : vector<8x32xf32>
    %cst_33 = arith.constant 1.000000e+00 : f32
    %67 = vector.broadcast %cst_33 : f32 to vector<8x32xf32>
    %68 = arith.addf %67, %66 : vector<8x32xf32>
    %69 = arith.divf %67, %68 : vector<8x32xf32>
    %70 = vector.extract_strided_slice %63 {offsets = [0, 32], sizes = [8, 32], strides = [1, 1]} : vector<8x128xf32> to vector<8x32xf32>
    %71 = arith.negf %70 : vector<8x32xf32>
    %72 = math.exp %71 : vector<8x32xf32>
    %cst_34 = arith.constant 1.000000e+00 : f32
    %73 = vector.broadcast %cst_34 : f32 to vector<8x32xf32>
    %74 = arith.addf %73, %72 : vector<8x32xf32>
    %75 = arith.divf %73, %74 : vector<8x32xf32>
    %76 = vector.extract_strided_slice %63 {offsets = [0, 64], sizes = [8, 32], strides = [1, 1]} : vector<8x128xf32> to vector<8x32xf32>
    %77 = math.tanh %76 : vector<8x32xf32>
    %78 = vector.extract_strided_slice %63 {offsets = [0, 96], sizes = [8, 32], strides = [1, 1]} : vector<8x128xf32> to vector<8x32xf32>
    %79 = arith.negf %78 : vector<8x32xf32>
    %80 = math.exp %79 : vector<8x32xf32>
    %cst_35 = arith.constant 1.000000e+00 : f32
    %81 = vector.broadcast %cst_35 : f32 to vector<8x32xf32>
    %82 = arith.addf %81, %80 : vector<8x32xf32>
    %83 = arith.divf %81, %82 : vector<8x32xf32>
    %84 = arith.mulf %75, %27 : vector<8x32xf32>
    %85 = arith.mulf %69, %77 : vector<8x32xf32>
    %86 = arith.addf %84, %85 : vector<8x32xf32>
    %87 = math.tanh %86 : vector<8x32xf32>
    %88 = arith.mulf %83, %87 : vector<8x32xf32>
    %89 = vector.extract_strided_slice %22 {offsets = [8, 0], sizes = [8, 128], strides = [1, 1]} : vector<64x128xf32> to vector<8x128xf32>
    %90 = arith.truncf %56 : vector<8x32xf32> to vector<8x32xbf16>
    %cst_36 = arith.constant dense<0.000000e+00> : vector<8x128xf32>
    %91 = tpu.matmul %90, %23, %cst_36 {dimension_numbers = #tpu.dot_dimension_numbers<[1], [0], [0], [1], [0, 0, 1, 1], [], []>} : vector<8x32xbf16>, vector<32x128xbf16>, vector<8x128xf32> -> vector<8x128xf32>
    %92 = arith.addf %89, %91 : vector<8x128xf32>
    %93 = vector.extract_strided_slice %92 {offsets = [0, 0], sizes = [8, 32], strides = [1, 1]} : vector<8x128xf32> to vector<8x32xf32>
    %94 = arith.negf %93 : vector<8x32xf32>
    %95 = math.exp %94 : vector<8x32xf32>
    %cst_37 = arith.constant 1.000000e+00 : f32
    %96 = vector.broadcast %cst_37 : f32 to vector<8x32xf32>
    %97 = arith.addf %96, %95 : vector<8x32xf32>
    %98 = arith.divf %96, %97 : vector<8x32xf32>
    %99 = vector.extract_strided_slice %92 {offsets = [0, 32], sizes = [8, 32], strides = [1, 1]} : vector<8x128xf32> to vector<8x32xf32>
    %100 = arith.negf %99 : vector<8x32xf32>
    %101 = math.exp %100 : vector<8x32xf32>
    %cst_38 = arith.constant 1.000000e+00 : f32
    %102 = vector.broadcast %cst_38 : f32 to vector<8x32xf32>
    %103 = arith.addf %102, %101 : vector<8x32xf32>
    %104 = arith.divf %102, %103 : vector<8x32xf32>
    %105 = vector.extract_strided_slice %92 {offsets = [0, 64], sizes = [8, 32], strides = [1, 1]} : vector<8x128xf32> to vector<8x32xf32>
    %106 = math.tanh %105 : vector<8x32xf32>
    %107 = vector.extract_strided_slice %92 {offsets = [0, 96], sizes = [8, 32], strides = [1, 1]} : vector<8x128xf32> to vector<8x32xf32>
    %108 = arith.negf %107 : vector<8x32xf32>
    %109 = math.exp %108 : vector<8x32xf32>
    %cst_39 = arith.constant 1.000000e+00 : f32
    %110 = vector.broadcast %cst_39 : f32 to vector<8x32xf32>
    %111 = arith.addf %110, %109 : vector<8x32xf32>
    %112 = arith.divf %110, %111 : vector<8x32xf32>
    %113 = arith.mulf %104, %54 : vector<8x32xf32>
    %114 = arith.mulf %98, %106 : vector<8x32xf32>
    %115 = arith.addf %113, %114 : vector<8x32xf32>
    %116 = math.tanh %115 : vector<8x32xf32>
    %117 = arith.mulf %112, %116 : vector<8x32xf32>
    %118 = arith.truncf %117 : vector<8x32xf32> to vector<8x32xbf16>
    %cst_40 = arith.constant dense<0.000000e+00> : vector<8x128xf32>
    %119 = tpu.matmul %118, %24, %cst_40 {dimension_numbers = #tpu.dot_dimension_numbers<[1], [0], [0], [1], [0, 0, 1, 1], [], []>} : vector<8x32xbf16>, vector<32x128xbf16>, vector<8x128xf32> -> vector<8x128xf32>
    %120 = arith.truncf %88 : vector<8x32xf32> to vector<8x32xbf16>
    %cst_41 = arith.constant dense<0.000000e+00> : vector<8x128xf32>
    %121 = tpu.matmul %120, %25, %cst_41 {dimension_numbers = #tpu.dot_dimension_numbers<[1], [0], [0], [1], [0, 0, 1, 1], [], []>} : vector<8x32xbf16>, vector<32x128xbf16>, vector<8x128xf32> -> vector<8x128xf32>
    %122 = arith.addf %119, %121 : vector<8x128xf32>
    %123 = vector.broadcast %26 : vector<1x128xf32> to vector<8x128xf32>
    %124 = arith.addf %122, %123 : vector<8x128xf32>
    %125 = vector.extract_strided_slice %124 {offsets = [0, 0], sizes = [8, 32], strides = [1, 1]} : vector<8x128xf32> to vector<8x32xf32>
    %126 = arith.negf %125 : vector<8x32xf32>
    %127 = math.exp %126 : vector<8x32xf32>
    %cst_42 = arith.constant 1.000000e+00 : f32
    %128 = vector.broadcast %cst_42 : f32 to vector<8x32xf32>
    %129 = arith.addf %128, %127 : vector<8x32xf32>
    %130 = arith.divf %128, %129 : vector<8x32xf32>
    %131 = vector.extract_strided_slice %124 {offsets = [0, 32], sizes = [8, 32], strides = [1, 1]} : vector<8x128xf32> to vector<8x32xf32>
    %132 = arith.negf %131 : vector<8x32xf32>
    %133 = math.exp %132 : vector<8x32xf32>
    %cst_43 = arith.constant 1.000000e+00 : f32
    %134 = vector.broadcast %cst_43 : f32 to vector<8x32xf32>
    %135 = arith.addf %134, %133 : vector<8x32xf32>
    %136 = arith.divf %134, %135 : vector<8x32xf32>
    %137 = vector.extract_strided_slice %124 {offsets = [0, 64], sizes = [8, 32], strides = [1, 1]} : vector<8x128xf32> to vector<8x32xf32>
    %138 = math.tanh %137 : vector<8x32xf32>
    %139 = vector.extract_strided_slice %124 {offsets = [0, 96], sizes = [8, 32], strides = [1, 1]} : vector<8x128xf32> to vector<8x32xf32>
    %140 = arith.negf %139 : vector<8x32xf32>
    %141 = math.exp %140 : vector<8x32xf32>
    %cst_44 = arith.constant 1.000000e+00 : f32
    %142 = vector.broadcast %cst_44 : f32 to vector<8x32xf32>
    %143 = arith.addf %142, %141 : vector<8x32xf32>
    %144 = arith.divf %142, %143 : vector<8x32xf32>
    %145 = arith.mulf %136, %86 : vector<8x32xf32>
    %146 = arith.mulf %130, %138 : vector<8x32xf32>
    %147 = arith.addf %145, %146 : vector<8x32xf32>
    %148 = math.tanh %147 : vector<8x32xf32>
    %149 = arith.mulf %144, %148 : vector<8x32xf32>
    %150 = vector.extract_strided_slice %22 {offsets = [16, 0], sizes = [8, 128], strides = [1, 1]} : vector<64x128xf32> to vector<8x128xf32>
    %151 = arith.truncf %117 : vector<8x32xf32> to vector<8x32xbf16>
    %cst_45 = arith.constant dense<0.000000e+00> : vector<8x128xf32>
    %152 = tpu.matmul %151, %23, %cst_45 {dimension_numbers = #tpu.dot_dimension_numbers<[1], [0], [0], [1], [0, 0, 1, 1], [], []>} : vector<8x32xbf16>, vector<32x128xbf16>, vector<8x128xf32> -> vector<8x128xf32>
    %153 = arith.addf %150, %152 : vector<8x128xf32>
    %154 = vector.extract_strided_slice %153 {offsets = [0, 0], sizes = [8, 32], strides = [1, 1]} : vector<8x128xf32> to vector<8x32xf32>
    %155 = arith.negf %154 : vector<8x32xf32>
    %156 = math.exp %155 : vector<8x32xf32>
    %cst_46 = arith.constant 1.000000e+00 : f32
    %157 = vector.broadcast %cst_46 : f32 to vector<8x32xf32>
    %158 = arith.addf %157, %156 : vector<8x32xf32>
    %159 = arith.divf %157, %158 : vector<8x32xf32>
    %160 = vector.extract_strided_slice %153 {offsets = [0, 32], sizes = [8, 32], strides = [1, 1]} : vector<8x128xf32> to vector<8x32xf32>
    %161 = arith.negf %160 : vector<8x32xf32>
    %162 = math.exp %161 : vector<8x32xf32>
    %cst_47 = arith.constant 1.000000e+00 : f32
    %163 = vector.broadcast %cst_47 : f32 to vector<8x32xf32>
    %164 = arith.addf %163, %162 : vector<8x32xf32>
    %165 = arith.divf %163, %164 : vector<8x32xf32>
    %166 = vector.extract_strided_slice %153 {offsets = [0, 64], sizes = [8, 32], strides = [1, 1]} : vector<8x128xf32> to vector<8x32xf32>
    %167 = math.tanh %166 : vector<8x32xf32>
    %168 = vector.extract_strided_slice %153 {offsets = [0, 96], sizes = [8, 32], strides = [1, 1]} : vector<8x128xf32> to vector<8x32xf32>
    %169 = arith.negf %168 : vector<8x32xf32>
    %170 = math.exp %169 : vector<8x32xf32>
    %cst_48 = arith.constant 1.000000e+00 : f32
    %171 = vector.broadcast %cst_48 : f32 to vector<8x32xf32>
    %172 = arith.addf %171, %170 : vector<8x32xf32>
    %173 = arith.divf %171, %172 : vector<8x32xf32>
    %174 = arith.mulf %165, %115 : vector<8x32xf32>
    %175 = arith.mulf %159, %167 : vector<8x32xf32>
    %176 = arith.addf %174, %175 : vector<8x32xf32>
    %177 = math.tanh %176 : vector<8x32xf32>
    %178 = arith.mulf %173, %177 : vector<8x32xf32>
    %179 = arith.truncf %178 : vector<8x32xf32> to vector<8x32xbf16>
    %cst_49 = arith.constant dense<0.000000e+00> : vector<8x128xf32>
    %180 = tpu.matmul %179, %24, %cst_49 {dimension_numbers = #tpu.dot_dimension_numbers<[1], [0], [0], [1], [0, 0, 1, 1], [], []>} : vector<8x32xbf16>, vector<32x128xbf16>, vector<8x128xf32> -> vector<8x128xf32>
    %181 = arith.truncf %149 : vector<8x32xf32> to vector<8x32xbf16>
    %cst_50 = arith.constant dense<0.000000e+00> : vector<8x128xf32>
    %182 = tpu.matmul %181, %25, %cst_50 {dimension_numbers = #tpu.dot_dimension_numbers<[1], [0], [0], [1], [0, 0, 1, 1], [], []>} : vector<8x32xbf16>, vector<32x128xbf16>, vector<8x128xf32> -> vector<8x128xf32>
    %183 = arith.addf %180, %182 : vector<8x128xf32>
    %184 = vector.broadcast %26 : vector<1x128xf32> to vector<8x128xf32>
    %185 = arith.addf %183, %184 : vector<8x128xf32>
    %186 = vector.extract_strided_slice %185 {offsets = [0, 0], sizes = [8, 32], strides = [1, 1]} : vector<8x128xf32> to vector<8x32xf32>
    %187 = arith.negf %186 : vector<8x32xf32>
    %188 = math.exp %187 : vector<8x32xf32>
    %cst_51 = arith.constant 1.000000e+00 : f32
    %189 = vector.broadcast %cst_51 : f32 to vector<8x32xf32>
    %190 = arith.addf %189, %188 : vector<8x32xf32>
    %191 = arith.divf %189, %190 : vector<8x32xf32>
    %192 = vector.extract_strided_slice %185 {offsets = [0, 32], sizes = [8, 32], strides = [1, 1]} : vector<8x128xf32> to vector<8x32xf32>
    %193 = arith.negf %192 : vector<8x32xf32>
    %194 = math.exp %193 : vector<8x32xf32>
    %cst_52 = arith.constant 1.000000e+00 : f32
    %195 = vector.broadcast %cst_52 : f32 to vector<8x32xf32>
    %196 = arith.addf %195, %194 : vector<8x32xf32>
    %197 = arith.divf %195, %196 : vector<8x32xf32>
    %198 = vector.extract_strided_slice %185 {offsets = [0, 64], sizes = [8, 32], strides = [1, 1]} : vector<8x128xf32> to vector<8x32xf32>
    %199 = math.tanh %198 : vector<8x32xf32>
    %200 = vector.extract_strided_slice %185 {offsets = [0, 96], sizes = [8, 32], strides = [1, 1]} : vector<8x128xf32> to vector<8x32xf32>
    %201 = arith.negf %200 : vector<8x32xf32>
    %202 = math.exp %201 : vector<8x32xf32>
    %cst_53 = arith.constant 1.000000e+00 : f32
    %203 = vector.broadcast %cst_53 : f32 to vector<8x32xf32>
    %204 = arith.addf %203, %202 : vector<8x32xf32>
    %205 = arith.divf %203, %204 : vector<8x32xf32>
    %206 = arith.mulf %197, %147 : vector<8x32xf32>
    %207 = arith.mulf %191, %199 : vector<8x32xf32>
    %208 = arith.addf %206, %207 : vector<8x32xf32>
    %209 = math.tanh %208 : vector<8x32xf32>
    %210 = arith.mulf %205, %209 : vector<8x32xf32>
    %211 = vector.extract_strided_slice %22 {offsets = [24, 0], sizes = [8, 128], strides = [1, 1]} : vector<64x128xf32> to vector<8x128xf32>
    %212 = arith.truncf %178 : vector<8x32xf32> to vector<8x32xbf16>
    %cst_54 = arith.constant dense<0.000000e+00> : vector<8x128xf32>
    %213 = tpu.matmul %212, %23, %cst_54 {dimension_numbers = #tpu.dot_dimension_numbers<[1], [0], [0], [1], [0, 0, 1, 1], [], []>} : vector<8x32xbf16>, vector<32x128xbf16>, vector<8x128xf32> -> vector<8x128xf32>
    %214 = arith.addf %211, %213 : vector<8x128xf32>
    %215 = vector.extract_strided_slice %214 {offsets = [0, 0], sizes = [8, 32], strides = [1, 1]} : vector<8x128xf32> to vector<8x32xf32>
    %216 = arith.negf %215 : vector<8x32xf32>
    %217 = math.exp %216 : vector<8x32xf32>
    %cst_55 = arith.constant 1.000000e+00 : f32
    %218 = vector.broadcast %cst_55 : f32 to vector<8x32xf32>
    %219 = arith.addf %218, %217 : vector<8x32xf32>
    %220 = arith.divf %218, %219 : vector<8x32xf32>
    %221 = vector.extract_strided_slice %214 {offsets = [0, 32], sizes = [8, 32], strides = [1, 1]} : vector<8x128xf32> to vector<8x32xf32>
    %222 = arith.negf %221 : vector<8x32xf32>
    %223 = math.exp %222 : vector<8x32xf32>
    %cst_56 = arith.constant 1.000000e+00 : f32
    %224 = vector.broadcast %cst_56 : f32 to vector<8x32xf32>
    %225 = arith.addf %224, %223 : vector<8x32xf32>
    %226 = arith.divf %224, %225 : vector<8x32xf32>
    %227 = vector.extract_strided_slice %214 {offsets = [0, 64], sizes = [8, 32], strides = [1, 1]} : vector<8x128xf32> to vector<8x32xf32>
    %228 = math.tanh %227 : vector<8x32xf32>
    %229 = vector.extract_strided_slice %214 {offsets = [0, 96], sizes = [8, 32], strides = [1, 1]} : vector<8x128xf32> to vector<8x32xf32>
    %230 = arith.negf %229 : vector<8x32xf32>
    %231 = math.exp %230 : vector<8x32xf32>
    %cst_57 = arith.constant 1.000000e+00 : f32
    %232 = vector.broadcast %cst_57 : f32 to vector<8x32xf32>
    %233 = arith.addf %232, %231 : vector<8x32xf32>
    %234 = arith.divf %232, %233 : vector<8x32xf32>
    %235 = arith.mulf %226, %176 : vector<8x32xf32>
    %236 = arith.mulf %220, %228 : vector<8x32xf32>
    %237 = arith.addf %235, %236 : vector<8x32xf32>
    %238 = math.tanh %237 : vector<8x32xf32>
    %239 = arith.mulf %234, %238 : vector<8x32xf32>
    %240 = arith.truncf %239 : vector<8x32xf32> to vector<8x32xbf16>
    %cst_58 = arith.constant dense<0.000000e+00> : vector<8x128xf32>
    %241 = tpu.matmul %240, %24, %cst_58 {dimension_numbers = #tpu.dot_dimension_numbers<[1], [0], [0], [1], [0, 0, 1, 1], [], []>} : vector<8x32xbf16>, vector<32x128xbf16>, vector<8x128xf32> -> vector<8x128xf32>
    %242 = arith.truncf %210 : vector<8x32xf32> to vector<8x32xbf16>
    %cst_59 = arith.constant dense<0.000000e+00> : vector<8x128xf32>
    %243 = tpu.matmul %242, %25, %cst_59 {dimension_numbers = #tpu.dot_dimension_numbers<[1], [0], [0], [1], [0, 0, 1, 1], [], []>} : vector<8x32xbf16>, vector<32x128xbf16>, vector<8x128xf32> -> vector<8x128xf32>
    %244 = arith.addf %241, %243 : vector<8x128xf32>
    %245 = vector.broadcast %26 : vector<1x128xf32> to vector<8x128xf32>
    %246 = arith.addf %244, %245 : vector<8x128xf32>
    %247 = vector.extract_strided_slice %246 {offsets = [0, 0], sizes = [8, 32], strides = [1, 1]} : vector<8x128xf32> to vector<8x32xf32>
    %248 = arith.negf %247 : vector<8x32xf32>
    %249 = math.exp %248 : vector<8x32xf32>
    %cst_60 = arith.constant 1.000000e+00 : f32
    %250 = vector.broadcast %cst_60 : f32 to vector<8x32xf32>
    %251 = arith.addf %250, %249 : vector<8x32xf32>
    %252 = arith.divf %250, %251 : vector<8x32xf32>
    %253 = vector.extract_strided_slice %246 {offsets = [0, 32], sizes = [8, 32], strides = [1, 1]} : vector<8x128xf32> to vector<8x32xf32>
    %254 = arith.negf %253 : vector<8x32xf32>
    %255 = math.exp %254 : vector<8x32xf32>
    %cst_61 = arith.constant 1.000000e+00 : f32
    %256 = vector.broadcast %cst_61 : f32 to vector<8x32xf32>
    %257 = arith.addf %256, %255 : vector<8x32xf32>
    %258 = arith.divf %256, %257 : vector<8x32xf32>
    %259 = vector.extract_strided_slice %246 {offsets = [0, 64], sizes = [8, 32], strides = [1, 1]} : vector<8x128xf32> to vector<8x32xf32>
    %260 = math.tanh %259 : vector<8x32xf32>
    %261 = vector.extract_strided_slice %246 {offsets = [0, 96], sizes = [8, 32], strides = [1, 1]} : vector<8x128xf32> to vector<8x32xf32>
    %262 = arith.negf %261 : vector<8x32xf32>
    %263 = math.exp %262 : vector<8x32xf32>
    %cst_62 = arith.constant 1.000000e+00 : f32
    %264 = vector.broadcast %cst_62 : f32 to vector<8x32xf32>
    %265 = arith.addf %264, %263 : vector<8x32xf32>
    %266 = arith.divf %264, %265 : vector<8x32xf32>
    %267 = arith.mulf %258, %208 : vector<8x32xf32>
    %268 = arith.mulf %252, %260 : vector<8x32xf32>
    %269 = arith.addf %267, %268 : vector<8x32xf32>
    %270 = math.tanh %269 : vector<8x32xf32>
    %271 = arith.mulf %266, %270 : vector<8x32xf32>
    %272 = vector.extract_strided_slice %22 {offsets = [32, 0], sizes = [8, 128], strides = [1, 1]} : vector<64x128xf32> to vector<8x128xf32>
    %273 = arith.truncf %239 : vector<8x32xf32> to vector<8x32xbf16>
    %cst_63 = arith.constant dense<0.000000e+00> : vector<8x128xf32>
    %274 = tpu.matmul %273, %23, %cst_63 {dimension_numbers = #tpu.dot_dimension_numbers<[1], [0], [0], [1], [0, 0, 1, 1], [], []>} : vector<8x32xbf16>, vector<32x128xbf16>, vector<8x128xf32> -> vector<8x128xf32>
    %275 = arith.addf %272, %274 : vector<8x128xf32>
    %276 = vector.extract_strided_slice %275 {offsets = [0, 0], sizes = [8, 32], strides = [1, 1]} : vector<8x128xf32> to vector<8x32xf32>
    %277 = arith.negf %276 : vector<8x32xf32>
    %278 = math.exp %277 : vector<8x32xf32>
    %cst_64 = arith.constant 1.000000e+00 : f32
    %279 = vector.broadcast %cst_64 : f32 to vector<8x32xf32>
    %280 = arith.addf %279, %278 : vector<8x32xf32>
    %281 = arith.divf %279, %280 : vector<8x32xf32>
    %282 = vector.extract_strided_slice %275 {offsets = [0, 32], sizes = [8, 32], strides = [1, 1]} : vector<8x128xf32> to vector<8x32xf32>
    %283 = arith.negf %282 : vector<8x32xf32>
    %284 = math.exp %283 : vector<8x32xf32>
    %cst_65 = arith.constant 1.000000e+00 : f32
    %285 = vector.broadcast %cst_65 : f32 to vector<8x32xf32>
    %286 = arith.addf %285, %284 : vector<8x32xf32>
    %287 = arith.divf %285, %286 : vector<8x32xf32>
    %288 = vector.extract_strided_slice %275 {offsets = [0, 64], sizes = [8, 32], strides = [1, 1]} : vector<8x128xf32> to vector<8x32xf32>
    %289 = math.tanh %288 : vector<8x32xf32>
    %290 = vector.extract_strided_slice %275 {offsets = [0, 96], sizes = [8, 32], strides = [1, 1]} : vector<8x128xf32> to vector<8x32xf32>
    %291 = arith.negf %290 : vector<8x32xf32>
    %292 = math.exp %291 : vector<8x32xf32>
    %cst_66 = arith.constant 1.000000e+00 : f32
    %293 = vector.broadcast %cst_66 : f32 to vector<8x32xf32>
    %294 = arith.addf %293, %292 : vector<8x32xf32>
    %295 = arith.divf %293, %294 : vector<8x32xf32>
    %296 = arith.mulf %287, %237 : vector<8x32xf32>
    %297 = arith.mulf %281, %289 : vector<8x32xf32>
    %298 = arith.addf %296, %297 : vector<8x32xf32>
    %299 = math.tanh %298 : vector<8x32xf32>
    %300 = arith.mulf %295, %299 : vector<8x32xf32>
    %301 = arith.truncf %300 : vector<8x32xf32> to vector<8x32xbf16>
    %cst_67 = arith.constant dense<0.000000e+00> : vector<8x128xf32>
    %302 = tpu.matmul %301, %24, %cst_67 {dimension_numbers = #tpu.dot_dimension_numbers<[1], [0], [0], [1], [0, 0, 1, 1], [], []>} : vector<8x32xbf16>, vector<32x128xbf16>, vector<8x128xf32> -> vector<8x128xf32>
    %303 = arith.truncf %271 : vector<8x32xf32> to vector<8x32xbf16>
    %cst_68 = arith.constant dense<0.000000e+00> : vector<8x128xf32>
    %304 = tpu.matmul %303, %25, %cst_68 {dimension_numbers = #tpu.dot_dimension_numbers<[1], [0], [0], [1], [0, 0, 1, 1], [], []>} : vector<8x32xbf16>, vector<32x128xbf16>, vector<8x128xf32> -> vector<8x128xf32>
    %305 = arith.addf %302, %304 : vector<8x128xf32>
    %306 = vector.broadcast %26 : vector<1x128xf32> to vector<8x128xf32>
    %307 = arith.addf %305, %306 : vector<8x128xf32>
    %308 = vector.extract_strided_slice %307 {offsets = [0, 0], sizes = [8, 32], strides = [1, 1]} : vector<8x128xf32> to vector<8x32xf32>
    %309 = arith.negf %308 : vector<8x32xf32>
    %310 = math.exp %309 : vector<8x32xf32>
    %cst_69 = arith.constant 1.000000e+00 : f32
    %311 = vector.broadcast %cst_69 : f32 to vector<8x32xf32>
    %312 = arith.addf %311, %310 : vector<8x32xf32>
    %313 = arith.divf %311, %312 : vector<8x32xf32>
    %314 = vector.extract_strided_slice %307 {offsets = [0, 32], sizes = [8, 32], strides = [1, 1]} : vector<8x128xf32> to vector<8x32xf32>
    %315 = arith.negf %314 : vector<8x32xf32>
    %316 = math.exp %315 : vector<8x32xf32>
    %cst_70 = arith.constant 1.000000e+00 : f32
    %317 = vector.broadcast %cst_70 : f32 to vector<8x32xf32>
    %318 = arith.addf %317, %316 : vector<8x32xf32>
    %319 = arith.divf %317, %318 : vector<8x32xf32>
    %320 = vector.extract_strided_slice %307 {offsets = [0, 64], sizes = [8, 32], strides = [1, 1]} : vector<8x128xf32> to vector<8x32xf32>
    %321 = math.tanh %320 : vector<8x32xf32>
    %322 = vector.extract_strided_slice %307 {offsets = [0, 96], sizes = [8, 32], strides = [1, 1]} : vector<8x128xf32> to vector<8x32xf32>
    %323 = arith.negf %322 : vector<8x32xf32>
    %324 = math.exp %323 : vector<8x32xf32>
    %cst_71 = arith.constant 1.000000e+00 : f32
    %325 = vector.broadcast %cst_71 : f32 to vector<8x32xf32>
    %326 = arith.addf %325, %324 : vector<8x32xf32>
    %327 = arith.divf %325, %326 : vector<8x32xf32>
    %328 = arith.mulf %319, %269 : vector<8x32xf32>
    %329 = arith.mulf %313, %321 : vector<8x32xf32>
    %330 = arith.addf %328, %329 : vector<8x32xf32>
    %331 = math.tanh %330 : vector<8x32xf32>
    %332 = arith.mulf %327, %331 : vector<8x32xf32>
    %333 = vector.extract_strided_slice %22 {offsets = [40, 0], sizes = [8, 128], strides = [1, 1]} : vector<64x128xf32> to vector<8x128xf32>
    %334 = arith.truncf %300 : vector<8x32xf32> to vector<8x32xbf16>
    %cst_72 = arith.constant dense<0.000000e+00> : vector<8x128xf32>
    %335 = tpu.matmul %334, %23, %cst_72 {dimension_numbers = #tpu.dot_dimension_numbers<[1], [0], [0], [1], [0, 0, 1, 1], [], []>} : vector<8x32xbf16>, vector<32x128xbf16>, vector<8x128xf32> -> vector<8x128xf32>
    %336 = arith.addf %333, %335 : vector<8x128xf32>
    %337 = vector.extract_strided_slice %336 {offsets = [0, 0], sizes = [8, 32], strides = [1, 1]} : vector<8x128xf32> to vector<8x32xf32>
    %338 = arith.negf %337 : vector<8x32xf32>
    %339 = math.exp %338 : vector<8x32xf32>
    %cst_73 = arith.constant 1.000000e+00 : f32
    %340 = vector.broadcast %cst_73 : f32 to vector<8x32xf32>
    %341 = arith.addf %340, %339 : vector<8x32xf32>
    %342 = arith.divf %340, %341 : vector<8x32xf32>
    %343 = vector.extract_strided_slice %336 {offsets = [0, 32], sizes = [8, 32], strides = [1, 1]} : vector<8x128xf32> to vector<8x32xf32>
    %344 = arith.negf %343 : vector<8x32xf32>
    %345 = math.exp %344 : vector<8x32xf32>
    %cst_74 = arith.constant 1.000000e+00 : f32
    %346 = vector.broadcast %cst_74 : f32 to vector<8x32xf32>
    %347 = arith.addf %346, %345 : vector<8x32xf32>
    %348 = arith.divf %346, %347 : vector<8x32xf32>
    %349 = vector.extract_strided_slice %336 {offsets = [0, 64], sizes = [8, 32], strides = [1, 1]} : vector<8x128xf32> to vector<8x32xf32>
    %350 = math.tanh %349 : vector<8x32xf32>
    %351 = vector.extract_strided_slice %336 {offsets = [0, 96], sizes = [8, 32], strides = [1, 1]} : vector<8x128xf32> to vector<8x32xf32>
    %352 = arith.negf %351 : vector<8x32xf32>
    %353 = math.exp %352 : vector<8x32xf32>
    %cst_75 = arith.constant 1.000000e+00 : f32
    %354 = vector.broadcast %cst_75 : f32 to vector<8x32xf32>
    %355 = arith.addf %354, %353 : vector<8x32xf32>
    %356 = arith.divf %354, %355 : vector<8x32xf32>
    %357 = arith.mulf %348, %298 : vector<8x32xf32>
    %358 = arith.mulf %342, %350 : vector<8x32xf32>
    %359 = arith.addf %357, %358 : vector<8x32xf32>
    %360 = math.tanh %359 : vector<8x32xf32>
    %361 = arith.mulf %356, %360 : vector<8x32xf32>
    %362 = arith.truncf %361 : vector<8x32xf32> to vector<8x32xbf16>
    %cst_76 = arith.constant dense<0.000000e+00> : vector<8x128xf32>
    %363 = tpu.matmul %362, %24, %cst_76 {dimension_numbers = #tpu.dot_dimension_numbers<[1], [0], [0], [1], [0, 0, 1, 1], [], []>} : vector<8x32xbf16>, vector<32x128xbf16>, vector<8x128xf32> -> vector<8x128xf32>
    %364 = arith.truncf %332 : vector<8x32xf32> to vector<8x32xbf16>
    %cst_77 = arith.constant dense<0.000000e+00> : vector<8x128xf32>
    %365 = tpu.matmul %364, %25, %cst_77 {dimension_numbers = #tpu.dot_dimension_numbers<[1], [0], [0], [1], [0, 0, 1, 1], [], []>} : vector<8x32xbf16>, vector<32x128xbf16>, vector<8x128xf32> -> vector<8x128xf32>
    %366 = arith.addf %363, %365 : vector<8x128xf32>
    %367 = vector.broadcast %26 : vector<1x128xf32> to vector<8x128xf32>
    %368 = arith.addf %366, %367 : vector<8x128xf32>
    %369 = vector.extract_strided_slice %368 {offsets = [0, 0], sizes = [8, 32], strides = [1, 1]} : vector<8x128xf32> to vector<8x32xf32>
    %370 = arith.negf %369 : vector<8x32xf32>
    %371 = math.exp %370 : vector<8x32xf32>
    %cst_78 = arith.constant 1.000000e+00 : f32
    %372 = vector.broadcast %cst_78 : f32 to vector<8x32xf32>
    %373 = arith.addf %372, %371 : vector<8x32xf32>
    %374 = arith.divf %372, %373 : vector<8x32xf32>
    %375 = vector.extract_strided_slice %368 {offsets = [0, 32], sizes = [8, 32], strides = [1, 1]} : vector<8x128xf32> to vector<8x32xf32>
    %376 = arith.negf %375 : vector<8x32xf32>
    %377 = math.exp %376 : vector<8x32xf32>
    %cst_79 = arith.constant 1.000000e+00 : f32
    %378 = vector.broadcast %cst_79 : f32 to vector<8x32xf32>
    %379 = arith.addf %378, %377 : vector<8x32xf32>
    %380 = arith.divf %378, %379 : vector<8x32xf32>
    %381 = vector.extract_strided_slice %368 {offsets = [0, 64], sizes = [8, 32], strides = [1, 1]} : vector<8x128xf32> to vector<8x32xf32>
    %382 = math.tanh %381 : vector<8x32xf32>
    %383 = vector.extract_strided_slice %368 {offsets = [0, 96], sizes = [8, 32], strides = [1, 1]} : vector<8x128xf32> to vector<8x32xf32>
    %384 = arith.negf %383 : vector<8x32xf32>
    %385 = math.exp %384 : vector<8x32xf32>
    %cst_80 = arith.constant 1.000000e+00 : f32
    %386 = vector.broadcast %cst_80 : f32 to vector<8x32xf32>
    %387 = arith.addf %386, %385 : vector<8x32xf32>
    %388 = arith.divf %386, %387 : vector<8x32xf32>
    %389 = arith.mulf %380, %330 : vector<8x32xf32>
    %390 = arith.mulf %374, %382 : vector<8x32xf32>
    %391 = arith.addf %389, %390 : vector<8x32xf32>
    %392 = math.tanh %391 : vector<8x32xf32>
    %393 = arith.mulf %388, %392 : vector<8x32xf32>
    %394 = vector.extract_strided_slice %22 {offsets = [48, 0], sizes = [8, 128], strides = [1, 1]} : vector<64x128xf32> to vector<8x128xf32>
    %395 = arith.truncf %361 : vector<8x32xf32> to vector<8x32xbf16>
    %cst_81 = arith.constant dense<0.000000e+00> : vector<8x128xf32>
    %396 = tpu.matmul %395, %23, %cst_81 {dimension_numbers = #tpu.dot_dimension_numbers<[1], [0], [0], [1], [0, 0, 1, 1], [], []>} : vector<8x32xbf16>, vector<32x128xbf16>, vector<8x128xf32> -> vector<8x128xf32>
    %397 = arith.addf %394, %396 : vector<8x128xf32>
    %398 = vector.extract_strided_slice %397 {offsets = [0, 0], sizes = [8, 32], strides = [1, 1]} : vector<8x128xf32> to vector<8x32xf32>
    %399 = arith.negf %398 : vector<8x32xf32>
    %400 = math.exp %399 : vector<8x32xf32>
    %cst_82 = arith.constant 1.000000e+00 : f32
    %401 = vector.broadcast %cst_82 : f32 to vector<8x32xf32>
    %402 = arith.addf %401, %400 : vector<8x32xf32>
    %403 = arith.divf %401, %402 : vector<8x32xf32>
    %404 = vector.extract_strided_slice %397 {offsets = [0, 32], sizes = [8, 32], strides = [1, 1]} : vector<8x128xf32> to vector<8x32xf32>
    %405 = arith.negf %404 : vector<8x32xf32>
    %406 = math.exp %405 : vector<8x32xf32>
    %cst_83 = arith.constant 1.000000e+00 : f32
    %407 = vector.broadcast %cst_83 : f32 to vector<8x32xf32>
    %408 = arith.addf %407, %406 : vector<8x32xf32>
    %409 = arith.divf %407, %408 : vector<8x32xf32>
    %410 = vector.extract_strided_slice %397 {offsets = [0, 64], sizes = [8, 32], strides = [1, 1]} : vector<8x128xf32> to vector<8x32xf32>
    %411 = math.tanh %410 : vector<8x32xf32>
    %412 = vector.extract_strided_slice %397 {offsets = [0, 96], sizes = [8, 32], strides = [1, 1]} : vector<8x128xf32> to vector<8x32xf32>
    %413 = arith.negf %412 : vector<8x32xf32>
    %414 = math.exp %413 : vector<8x32xf32>
    %cst_84 = arith.constant 1.000000e+00 : f32
    %415 = vector.broadcast %cst_84 : f32 to vector<8x32xf32>
    %416 = arith.addf %415, %414 : vector<8x32xf32>
    %417 = arith.divf %415, %416 : vector<8x32xf32>
    %418 = arith.mulf %409, %359 : vector<8x32xf32>
    %419 = arith.mulf %403, %411 : vector<8x32xf32>
    %420 = arith.addf %418, %419 : vector<8x32xf32>
    %421 = math.tanh %420 : vector<8x32xf32>
    %422 = arith.mulf %417, %421 : vector<8x32xf32>
    %423 = arith.truncf %422 : vector<8x32xf32> to vector<8x32xbf16>
    %cst_85 = arith.constant dense<0.000000e+00> : vector<8x128xf32>
    %424 = tpu.matmul %423, %24, %cst_85 {dimension_numbers = #tpu.dot_dimension_numbers<[1], [0], [0], [1], [0, 0, 1, 1], [], []>} : vector<8x32xbf16>, vector<32x128xbf16>, vector<8x128xf32> -> vector<8x128xf32>
    %425 = arith.truncf %393 : vector<8x32xf32> to vector<8x32xbf16>
    %cst_86 = arith.constant dense<0.000000e+00> : vector<8x128xf32>
    %426 = tpu.matmul %425, %25, %cst_86 {dimension_numbers = #tpu.dot_dimension_numbers<[1], [0], [0], [1], [0, 0, 1, 1], [], []>} : vector<8x32xbf16>, vector<32x128xbf16>, vector<8x128xf32> -> vector<8x128xf32>
    %427 = arith.addf %424, %426 : vector<8x128xf32>
    %428 = vector.broadcast %26 : vector<1x128xf32> to vector<8x128xf32>
    %429 = arith.addf %427, %428 : vector<8x128xf32>
    %430 = vector.extract_strided_slice %429 {offsets = [0, 0], sizes = [8, 32], strides = [1, 1]} : vector<8x128xf32> to vector<8x32xf32>
    %431 = arith.negf %430 : vector<8x32xf32>
    %432 = math.exp %431 : vector<8x32xf32>
    %cst_87 = arith.constant 1.000000e+00 : f32
    %433 = vector.broadcast %cst_87 : f32 to vector<8x32xf32>
    %434 = arith.addf %433, %432 : vector<8x32xf32>
    %435 = arith.divf %433, %434 : vector<8x32xf32>
    %436 = vector.extract_strided_slice %429 {offsets = [0, 32], sizes = [8, 32], strides = [1, 1]} : vector<8x128xf32> to vector<8x32xf32>
    %437 = arith.negf %436 : vector<8x32xf32>
    %438 = math.exp %437 : vector<8x32xf32>
    %cst_88 = arith.constant 1.000000e+00 : f32
    %439 = vector.broadcast %cst_88 : f32 to vector<8x32xf32>
    %440 = arith.addf %439, %438 : vector<8x32xf32>
    %441 = arith.divf %439, %440 : vector<8x32xf32>
    %442 = vector.extract_strided_slice %429 {offsets = [0, 64], sizes = [8, 32], strides = [1, 1]} : vector<8x128xf32> to vector<8x32xf32>
    %443 = math.tanh %442 : vector<8x32xf32>
    %444 = vector.extract_strided_slice %429 {offsets = [0, 96], sizes = [8, 32], strides = [1, 1]} : vector<8x128xf32> to vector<8x32xf32>
    %445 = arith.negf %444 : vector<8x32xf32>
    %446 = math.exp %445 : vector<8x32xf32>
    %cst_89 = arith.constant 1.000000e+00 : f32
    %447 = vector.broadcast %cst_89 : f32 to vector<8x32xf32>
    %448 = arith.addf %447, %446 : vector<8x32xf32>
    %449 = arith.divf %447, %448 : vector<8x32xf32>
    %450 = arith.mulf %441, %391 : vector<8x32xf32>
    %451 = arith.mulf %435, %443 : vector<8x32xf32>
    %452 = arith.addf %450, %451 : vector<8x32xf32>
    %453 = math.tanh %452 : vector<8x32xf32>
    %454 = arith.mulf %449, %453 : vector<8x32xf32>
    %455 = vector.extract_strided_slice %22 {offsets = [56, 0], sizes = [8, 128], strides = [1, 1]} : vector<64x128xf32> to vector<8x128xf32>
    %456 = arith.truncf %422 : vector<8x32xf32> to vector<8x32xbf16>
    %cst_90 = arith.constant dense<0.000000e+00> : vector<8x128xf32>
    %457 = tpu.matmul %456, %23, %cst_90 {dimension_numbers = #tpu.dot_dimension_numbers<[1], [0], [0], [1], [0, 0, 1, 1], [], []>} : vector<8x32xbf16>, vector<32x128xbf16>, vector<8x128xf32> -> vector<8x128xf32>
    %458 = arith.addf %455, %457 : vector<8x128xf32>
    %459 = vector.extract_strided_slice %458 {offsets = [0, 0], sizes = [8, 32], strides = [1, 1]} : vector<8x128xf32> to vector<8x32xf32>
    %460 = arith.negf %459 : vector<8x32xf32>
    %461 = math.exp %460 : vector<8x32xf32>
    %cst_91 = arith.constant 1.000000e+00 : f32
    %462 = vector.broadcast %cst_91 : f32 to vector<8x32xf32>
    %463 = arith.addf %462, %461 : vector<8x32xf32>
    %464 = arith.divf %462, %463 : vector<8x32xf32>
    %465 = vector.extract_strided_slice %458 {offsets = [0, 32], sizes = [8, 32], strides = [1, 1]} : vector<8x128xf32> to vector<8x32xf32>
    %466 = arith.negf %465 : vector<8x32xf32>
    %467 = math.exp %466 : vector<8x32xf32>
    %cst_92 = arith.constant 1.000000e+00 : f32
    %468 = vector.broadcast %cst_92 : f32 to vector<8x32xf32>
    %469 = arith.addf %468, %467 : vector<8x32xf32>
    %470 = arith.divf %468, %469 : vector<8x32xf32>
    %471 = vector.extract_strided_slice %458 {offsets = [0, 64], sizes = [8, 32], strides = [1, 1]} : vector<8x128xf32> to vector<8x32xf32>
    %472 = math.tanh %471 : vector<8x32xf32>
    %473 = vector.extract_strided_slice %458 {offsets = [0, 96], sizes = [8, 32], strides = [1, 1]} : vector<8x128xf32> to vector<8x32xf32>
    %474 = arith.negf %473 : vector<8x32xf32>
    %475 = math.exp %474 : vector<8x32xf32>
    %cst_93 = arith.constant 1.000000e+00 : f32
    %476 = vector.broadcast %cst_93 : f32 to vector<8x32xf32>
    %477 = arith.addf %476, %475 : vector<8x32xf32>
    %478 = arith.divf %476, %477 : vector<8x32xf32>
    %479 = arith.mulf %470, %420 : vector<8x32xf32>
    %480 = arith.mulf %464, %472 : vector<8x32xf32>
    %481 = arith.addf %479, %480 : vector<8x32xf32>
    %482 = math.tanh %481 : vector<8x32xf32>
    %483 = arith.mulf %478, %482 : vector<8x32xf32>
    %484 = arith.truncf %483 : vector<8x32xf32> to vector<8x32xbf16>
    %cst_94 = arith.constant dense<0.000000e+00> : vector<8x128xf32>
    %485 = tpu.matmul %484, %24, %cst_94 {dimension_numbers = #tpu.dot_dimension_numbers<[1], [0], [0], [1], [0, 0, 1, 1], [], []>} : vector<8x32xbf16>, vector<32x128xbf16>, vector<8x128xf32> -> vector<8x128xf32>
    %486 = arith.truncf %454 : vector<8x32xf32> to vector<8x32xbf16>
    %cst_95 = arith.constant dense<0.000000e+00> : vector<8x128xf32>
    %487 = tpu.matmul %486, %25, %cst_95 {dimension_numbers = #tpu.dot_dimension_numbers<[1], [0], [0], [1], [0, 0, 1, 1], [], []>} : vector<8x32xbf16>, vector<32x128xbf16>, vector<8x128xf32> -> vector<8x128xf32>
    %488 = arith.addf %485, %487 : vector<8x128xf32>
    %489 = vector.broadcast %26 : vector<1x128xf32> to vector<8x128xf32>
    %490 = arith.addf %488, %489 : vector<8x128xf32>
    %491 = vector.extract_strided_slice %490 {offsets = [0, 0], sizes = [8, 32], strides = [1, 1]} : vector<8x128xf32> to vector<8x32xf32>
    %492 = arith.negf %491 : vector<8x32xf32>
    %493 = math.exp %492 : vector<8x32xf32>
    %cst_96 = arith.constant 1.000000e+00 : f32
    %494 = vector.broadcast %cst_96 : f32 to vector<8x32xf32>
    %495 = arith.addf %494, %493 : vector<8x32xf32>
    %496 = arith.divf %494, %495 : vector<8x32xf32>
    %497 = vector.extract_strided_slice %490 {offsets = [0, 32], sizes = [8, 32], strides = [1, 1]} : vector<8x128xf32> to vector<8x32xf32>
    %498 = arith.negf %497 : vector<8x32xf32>
    %499 = math.exp %498 : vector<8x32xf32>
    %cst_97 = arith.constant 1.000000e+00 : f32
    %500 = vector.broadcast %cst_97 : f32 to vector<8x32xf32>
    %501 = arith.addf %500, %499 : vector<8x32xf32>
    %502 = arith.divf %500, %501 : vector<8x32xf32>
    %503 = vector.extract_strided_slice %490 {offsets = [0, 64], sizes = [8, 32], strides = [1, 1]} : vector<8x128xf32> to vector<8x32xf32>
    %504 = math.tanh %503 : vector<8x32xf32>
    %505 = vector.extract_strided_slice %490 {offsets = [0, 96], sizes = [8, 32], strides = [1, 1]} : vector<8x128xf32> to vector<8x32xf32>
    %506 = arith.negf %505 : vector<8x32xf32>
    %507 = math.exp %506 : vector<8x32xf32>
    %cst_98 = arith.constant 1.000000e+00 : f32
    %508 = vector.broadcast %cst_98 : f32 to vector<8x32xf32>
    %509 = arith.addf %508, %507 : vector<8x32xf32>
    %510 = arith.divf %508, %509 : vector<8x32xf32>
    %511 = arith.mulf %502, %452 : vector<8x32xf32>
    %512 = arith.mulf %496, %504 : vector<8x32xf32>
    %513 = arith.addf %511, %512 : vector<8x32xf32>
    %514 = math.tanh %513 : vector<8x32xf32>
    %515 = arith.mulf %510, %514 : vector<8x32xf32>
    %c0_99 = arith.constant 0 : index
    %c0_100 = arith.constant 0 : index
    %516 = vector.load %arg12[%c0_99, %c0_100] : memref<64x128xbf16, #tpu.memory_space<vmem>>, vector<64x128xbf16>
    %517 = vector.extract_strided_slice %516 {offsets = [0, 0], sizes = [32, 128], strides = [1, 1]} : vector<64x128xbf16> to vector<32x128xbf16>
    %518 = arith.truncf %483 : vector<8x32xf32> to vector<8x32xbf16>
    %cst_101 = arith.constant dense<0.000000e+00> : vector<8x128xf32>
    %519 = tpu.matmul %518, %517, %cst_101 {dimension_numbers = #tpu.dot_dimension_numbers<[1], [0], [0], [1], [0, 0, 1, 1], [], []>} : vector<8x32xbf16>, vector<32x128xbf16>, vector<8x128xf32> -> vector<8x128xf32>
    %520 = vector.extract_strided_slice %516 {offsets = [32, 0], sizes = [32, 128], strides = [1, 1]} : vector<64x128xbf16> to vector<32x128xbf16>
    %521 = arith.truncf %515 : vector<8x32xf32> to vector<8x32xbf16>
    %cst_102 = arith.constant dense<0.000000e+00> : vector<8x128xf32>
    %522 = tpu.matmul %521, %520, %cst_102 {dimension_numbers = #tpu.dot_dimension_numbers<[1], [0], [0], [1], [0, 0, 1, 1], [], []>} : vector<8x32xbf16>, vector<32x128xbf16>, vector<8x128xf32> -> vector<8x128xf32>
    %523 = arith.addf %519, %522 : vector<8x128xf32>
    %c0_103 = arith.constant 0 : index
    %c0_104 = arith.constant 0 : index
    %524 = vector.load %arg13[%c0_103, %c0_104] : memref<1x128xf32, #tpu.memory_space<vmem>>, vector<1x128xf32>
    %525 = vector.broadcast %524 : vector<1x128xf32> to vector<8x128xf32>
    %526 = arith.addf %523, %525 : vector<8x128xf32>
    %527 = math.tanh %526 : vector<8x128xf32>
    %528 = arith.mulf %527, %7 : vector<8x128xf32>
    %c0_105 = arith.constant 0 : index
    %c0_106 = arith.constant 0 : index
    %529 = vector.load %arg14[%c0_105, %c0_106] : memref<128x128xbf16, #tpu.memory_space<vmem>>, vector<128x128xbf16>
    %530 = arith.truncf %528 : vector<8x128xf32> to vector<8x128xbf16>
    %cst_107 = arith.constant dense<0.000000e+00> : vector<8x128xf32>
    %531 = tpu.matmul %530, %529, %cst_107 {dimension_numbers = #tpu.dot_dimension_numbers<[1], [0], [0], [1], [0, 0, 1, 1], [], []>} : vector<8x128xbf16>, vector<128x128xbf16>, vector<8x128xf32> -> vector<8x128xf32>
    %c0_108 = arith.constant 0 : index
    %c0_109 = arith.constant 0 : index
    %532 = vector.load %arg15[%c0_108, %c0_109] : memref<1x128xf32, #tpu.memory_space<vmem>>, vector<1x128xf32>
    %533 = vector.broadcast %532 : vector<1x128xf32> to vector<8x128xf32>
    %534 = arith.addf %531, %533 : vector<8x128xf32>
    %c0_110 = arith.constant 0 : index
    %c0_111 = arith.constant 0 : index
    %535 = vector.load %arg16[%c0_110, %c0_111] : memref<8x128xf32, #tpu.memory_space<vmem>>, vector<8x128xf32>
    tpu.vector_store %arg16[%c0_110, %c0_111], %534 {strides = array<i32>} : memref<8x128xf32, #tpu.memory_space<vmem>>, vector<8x128xf32>,
    return
  }
}

</mosaic_0001>

<llo_original>
// kernel: deeper_lstm_forward.1
$region0: #{deeper_lstm_forward.1}
  #allocation0 [shape = 'u32[]', space=smem, size = 0x4, offset = 0x4, fixed_abs, tag = 'smem constant byte address 0x4 - core index']
  #allocation1 [shape = 'u32[144,128]{1,0:T(1,128)}', space=vmem, size = 0x12000, scoped, tag = 'internal scratch']
  %s0 = inlined_call_operand.vmem [shape: f32[8,128], index: 0, kind: input, shape index: {}]
  %s1 = inlined_call_operand.vmem [shape: f32[8,8,128], index: 1, kind: input, shape index: {}]
  %s2 = inlined_call_operand.vmem [shape: bf16[128,128], index: 2, kind: input, shape index: {}]
  %s3 = inlined_call_operand.vmem [shape: f32[1,128], index: 3, kind: input, shape index: {}]
  %s4 = inlined_call_operand.vmem [shape: bf16[128,32], index: 4, kind: input, shape index: {}]
  %s5 = inlined_call_operand.hbm [shape: f32[1,32], index: 5, kind: input, shape index: {}]
  %s6 = inlined_call_operand.vmem [shape: bf16[32,128], index: 6, kind: input, shape index: {}]
  %s7 = inlined_call_operand.vmem [shape: bf16[32,128], index: 7, kind: input, shape index: {}]
  %s8 = inlined_call_operand.hbm [shape: f32[1,128], index: 8, kind: input, shape index: {}]
  %s9 = inlined_call_operand.vmem [shape: bf16[32,128], index: 9, kind: input, shape index: {}]
  %s10 = inlined_call_operand.vmem [shape: bf16[32,128], index: 10, kind: input, shape index: {}]
  %s11 = inlined_call_operand.hbm [shape: f32[1,128], index: 11, kind: input, shape index: {}]
  %s12 = inlined_call_operand.vmem [shape: bf16[64,128], index: 12, kind: input, shape index: {}]
  %s13 = inlined_call_operand.hbm [shape: f32[1,128], index: 13, kind: input, shape index: {}]
  %s14 = inlined_call_operand.vmem [shape: bf16[128,128], index: 14, kind: input, shape index: {}]
  %s15 = inlined_call_operand.hbm [shape: f32[1,128], index: 15, kind: input, shape index: {}]
  %s16 = inlined_call_operand.vmem [shape: f32[8,128], index: 16, kind: output, shape index: {}]
  %s17 = sld [smem:[#allocation0]]
  $region94: #{deeper_lstm_forward.1} parent=0
    _
  %s19 = ssub.s32 1, %s17
  %s20 = scalar_select 0, %s19, %s17
  $region1: #{deeper_lstm_forward.1} parent=0
    #allocation2 [shape = 'u8[512]{0}', space=vmem, size = 0x400, scoped, tag = 'input window, operand 5, single buffered']
    #allocation3 [shape = 's32[1]{0}', space=sflag, size = 0x4, scoped, tag = 'scoped memory for deeper_lstm_forward.1']
    #allocation4 [shape = 'u8[512]{0}', space=vmem, size = 0x400, scoped, tag = 'input window, operand 8, single buffered']
    #allocation5 [shape = 's32[1]{0}', space=sflag, size = 0x4, scoped, tag = 'scoped memory for deeper_lstm_forward.1']
    #allocation6 [shape = 'u8[512]{0}', space=vmem, size = 0x400, scoped, tag = 'input window, operand 11, single buffered']
    #allocation7 [shape = 'u8[512]{0}', space=vmem, size = 0x400, scoped, tag = 'input window, operand 13, single buffered']
    #allocation8 [shape = 's32[1]{0}', space=sflag, size = 0x4, scoped, tag = 'scoped memory for deeper_lstm_forward.1']
    #allocation9 [shape = 'u8[512]{0}', space=vmem, size = 0x400, scoped, tag = 'input window, operand 15, single buffered']
    %21 = vsyncpa [#allocation3], 0
    %22 = vsyncpa [#allocation5], 0
    %23 = vsyncpa [#allocation8], 0
    // Predicated region
    $region2: #{deeper_lstm_forward.1} parent=1 // pred_check
      _
    $region3: #{deeper_lstm_forward.1} parent=1 // pred_check_branch
      %25 = sbr.rel (0) target = $region5
    $region4: #{deeper_lstm_forward.1} parent=1 // pred_region
      _
    $region5: #{deeper_lstm_forward.1} parent=1 // pred_fallthru
      _
    // Predicated region
    $region6: #{deeper_lstm_forward.1} parent=1 // pred_check
      _
    $region7: #{deeper_lstm_forward.1} parent=1 // pred_check_branch
      %27 = sbr.rel (0) target = $region9
    $region8: #{deeper_lstm_forward.1} parent=1 // pred_region
      _
    $region9: #{deeper_lstm_forward.1} parent=1 // pred_fallthru
      _
    // Predicated region
    $region10: #{deeper_lstm_forward.1} parent=1 // pred_check
      _
    $region11: #{deeper_lstm_forward.1} parent=1 // pred_check_branch
      %29 = sbr.rel (0) target = $region13
    $region12: #{deeper_lstm_forward.1} parent=1 // pred_region
      _
    $region13: #{deeper_lstm_forward.1} parent=1 // pred_fallthru
      _
    // Predicated region
    $region14: #{deeper_lstm_forward.1} parent=1 // pred_check
      _
    $region15: #{deeper_lstm_forward.1} parent=1 // pred_check_branch
      %31 = sbr.rel (0) target = $region17
    $region16: #{deeper_lstm_forward.1} parent=1 // pred_region
      _
    $region17: #{deeper_lstm_forward.1} parent=1 // pred_fallthru
      _
    // Predicated region
    $region18: #{deeper_lstm_forward.1} parent=1 // pred_check
      _
    $region19: #{deeper_lstm_forward.1} parent=1 // pred_check_branch
      %33 = sbr.rel (0) target = $region21
    $region20: #{deeper_lstm_forward.1} parent=1 // pred_region
      _
    $region21: #{deeper_lstm_forward.1} parent=1 // pred_fallthru
      _
    // Predicated region
    $region22: #{deeper_lstm_forward.1} parent=1 // pred_check
      _
    $region23: #{deeper_lstm_forward.1} parent=1 // pred_check_branch
      %35 = sbr.rel (0) target = $region25
    $region24: #{deeper_lstm_forward.1} parent=1 // pred_region
      %s37 = ssub.s32 16, 16
      %38 = vsyncadd [#allocation3], %s37
      %s40 = sshll.u32 [#allocation2], 4
      %s41 = int_to_ptr.vmem [resolvable:$true] %s40
      %43 = dma.hbm_to_vmem [thread:$0]  %s5, 16, %s41, [#allocation3]
    $region25: #{deeper_lstm_forward.1} parent=1 // pred_fallthru
      _
    // Predicated region
    $region26: #{deeper_lstm_forward.1} parent=1 // pred_check
      _
    $region27: #{deeper_lstm_forward.1} parent=1 // pred_check_branch
      %45 = sbr.rel (0) target = $region29
    $region28: #{deeper_lstm_forward.1} parent=1 // pred_region
      _
    $region29: #{deeper_lstm_forward.1} parent=1 // pred_fallthru
      _
    // Predicated region
    $region30: #{deeper_lstm_forward.1} parent=1 // pred_check
      _
    $region31: #{deeper_lstm_forward.1} parent=1 // pred_check_branch
      %47 = sbr.rel (0) target = $region33
    $region32: #{deeper_lstm_forward.1} parent=1 // pred_region
      _
    $region33: #{deeper_lstm_forward.1} parent=1 // pred_fallthru
      _
    // Predicated region
    $region34: #{deeper_lstm_forward.1} parent=1 // pred_check
      _
    $region35: #{deeper_lstm_forward.1} parent=1 // pred_check_branch
      %49 = sbr.rel (0) target = $region37
    $region36: #{deeper_lstm_forward.1} parent=1 // pred_region
      %s51 = ssub.s32 16, 16
      %52 = vsyncadd [#allocation5], %s51
      %s54 = sshll.u32 [#allocation4], 4
      %s55 = int_to_ptr.vmem [resolvable:$true] %s54
      %57 = dma.hbm_to_vmem [thread:$0]  %s8, 16, %s55, [#allocation5]
    $region37: #{deeper_lstm_forward.1} parent=1 // pred_fallthru
      _
    // Predicated region
    $region38: #{deeper_lstm_forward.1} parent=1 // pred_check
      _
    $region39: #{deeper_lstm_forward.1} parent=1 // pred_check_branch
      %59 = sbr.rel (0) target = $region41
    $region40: #{deeper_lstm_forward.1} parent=1 // pred_region
      _
    $region41: #{deeper_lstm_forward.1} parent=1 // pred_fallthru
      _
    // Predicated region
    $region42: #{deeper_lstm_forward.1} parent=1 // pred_check
      _
    $region43: #{deeper_lstm_forward.1} parent=1 // pred_check_branch
      %61 = sbr.rel (0) target = $region45
    $region44: #{deeper_lstm_forward.1} parent=1 // pred_region
      _
    $region45: #{deeper_lstm_forward.1} parent=1 // pred_fallthru
      _
    // Predicated region
    $region46: #{deeper_lstm_forward.1} parent=1 // pred_check
      _
    $region47: #{deeper_lstm_forward.1} parent=1 // pred_check_branch
      %63 = sbr.rel (0) target = $region49
    $region48: #{deeper_lstm_forward.1} parent=1 // pred_region
      %s65 = ssub.s32 16, 16
      %66 = vsyncadd [#allocation5], %s65
      %s68 = sshll.u32 [#allocation6], 4
      %s69 = int_to_ptr.vmem [resolvable:$true] %s68
      %71 = dma.hbm_to_vmem [thread:$0]  %s11, 16, %s69, [#allocation5]
    $region49: #{deeper_lstm_forward.1} parent=1 // pred_fallthru
      _
    // Predicated region
    $region50: #{deeper_lstm_forward.1} parent=1 // pred_check
      _
    $region51: #{deeper_lstm_forward.1} parent=1 // pred_check_branch
      %73 = sbr.rel (0) target = $region53
    $region52: #{deeper_lstm_forward.1} parent=1 // pred_region
      _
    $region53: #{deeper_lstm_forward.1} parent=1 // pred_fallthru
      _
    // Predicated region
    $region54: #{deeper_lstm_forward.1} parent=1 // pred_check
      _
    $region55: #{deeper_lstm_forward.1} parent=1 // pred_check_branch
      %75 = sbr.rel (0) target = $region57
    $region56: #{deeper_lstm_forward.1} parent=1 // pred_region
      %s77 = ssub.s32 16, 16
      %78 = vsyncadd [#allocation8], %s77
      %s80 = sshll.u32 [#allocation7], 4
      %s81 = int_to_ptr.vmem [resolvable:$true] %s80
      %83 = dma.hbm_to_vmem [thread:$0]  %s13, 16, %s81, [#allocation8]
    $region57: #{deeper_lstm_forward.1} parent=1 // pred_fallthru
      _
    // Predicated region
    $region58: #{deeper_lstm_forward.1} parent=1 // pred_check
      _
    $region59: #{deeper_lstm_forward.1} parent=1 // pred_check_branch
      %85 = sbr.rel (0) target = $region61
    $region60: #{deeper_lstm_forward.1} parent=1 // pred_region
      _
    $region61: #{deeper_lstm_forward.1} parent=1 // pred_fallthru
      _
    // Predicated region
    $region62: #{deeper_lstm_forward.1} parent=1 // pred_check
      _
    $region63: #{deeper_lstm_forward.1} parent=1 // pred_check_branch
      %87 = sbr.rel (0) target = $region65
    $region64: #{deeper_lstm_forward.1} parent=1 // pred_region
      %s89 = ssub.s32 16, 16
      %90 = vsyncadd [#allocation8], %s89
      %s92 = sshll.u32 [#allocation9], 4
      %s93 = int_to_ptr.vmem [resolvable:$true] %s92
      %95 = dma.hbm_to_vmem [thread:$0]  %s15, 16, %s93, [#allocation8]
    $region65: #{deeper_lstm_forward.1} parent=1 // pred_fallthru
      _
    // Predicated region
    $region66: #{deeper_lstm_forward.1} parent=1 // pred_check
      _
    $region67: #{deeper_lstm_forward.1} parent=1 // pred_check_branch
      %97 = sbr.rel (0) target = $region69
    $region68: #{deeper_lstm_forward.1} parent=1 // pred_region
      %98 = dma.done [#allocation3], 16
    $region69: #{deeper_lstm_forward.1} parent=1 // pred_fallthru
      _
    // Predicated region
    $region70: #{deeper_lstm_forward.1} parent=1 // pred_check
      _
    $region71: #{deeper_lstm_forward.1} parent=1 // pred_check_branch
      %100 = sbr.rel (0) target = $region73
    $region72: #{deeper_lstm_forward.1} parent=1 // pred_region
      %101 = dma.done [#allocation5], 16
    $region73: #{deeper_lstm_forward.1} parent=1 // pred_fallthru
      _
    // Predicated region
    $region74: #{deeper_lstm_forward.1} parent=1 // pred_check
      _
    $region75: #{deeper_lstm_forward.1} parent=1 // pred_check_branch
      %103 = sbr.rel (0) target = $region77
    $region76: #{deeper_lstm_forward.1} parent=1 // pred_region
      %104 = dma.done [#allocation5], 16
    $region77: #{deeper_lstm_forward.1} parent=1 // pred_fallthru
      _
    // Predicated region
    $region78: #{deeper_lstm_forward.1} parent=1 // pred_check
      _
    $region79: #{deeper_lstm_forward.1} parent=1 // pred_check_branch
      %106 = sbr.rel (0) target = $region81
    $region80: #{deeper_lstm_forward.1} parent=1 // pred_region
      %107 = dma.done [#allocation8], 16
    $region81: #{deeper_lstm_forward.1} parent=1 // pred_fallthru
      _
    // Predicated region
    $region82: #{deeper_lstm_forward.1} parent=1 // pred_check
      _
    $region83: #{deeper_lstm_forward.1} parent=1 // pred_check_branch
      %109 = sbr.rel (0) target = $region85
    $region84: #{deeper_lstm_forward.1} parent=1 // pred_region
      %110 = dma.done [#allocation8], 16
    $region85: #{deeper_lstm_forward.1} parent=1 // pred_fallthru
      _
    %v112 = vld [vmem:[%s0] sm:$0xff]
    %v113 = vld [vmem:[%s2] sm:$0xf]
    %v114 = vld [vmem:[%s2 + $0x4] sm:$0xf]
    %v115 = vld [vmem:[%s2 + $0x8] sm:$0xf]
    %v116 = vld [vmem:[%s2 + $0xc] sm:$0xf]
    %v117 = vld [vmem:[%s2 + $0x10] sm:$0xf]
    %v118 = vld [vmem:[%s2 + $0x14] sm:$0xf]
    %v119 = vld [vmem:[%s2 + $0x18] sm:$0xf]
    %v120 = vld [vmem:[%s2 + $0x1c] sm:$0xf]
    %v121 = vld [vmem:[%s2 + $0x20] sm:$0xf]
    %v122 = vld [vmem:[%s2 + $0x24] sm:$0xf]
    %v123 = vld [vmem:[%s2 + $0x28] sm:$0xf]
    %v124 = vld [vmem:[%s2 + $0x2c] sm:$0xf]
    %v125 = vld [vmem:[%s2 + $0x30] sm:$0xf]
    %v126 = vld [vmem:[%s2 + $0x34] sm:$0xf]
    %v127 = vld [vmem:[%s2 + $0x38] sm:$0xf]
    %v128 = vld [vmem:[%s2 + $0x3c] sm:$0xf]
    %v129 = vpack.c.bf16 %v112, %v112
    %v130 = vld [vmem:[%s3] sm:$0x1]
    %v132 = vlaneseq
    %v133 = vshrl.u32 %v132, 7
    %v134 = vsub.s32 0, %v133
    %v135 = vrot.slane %v130, %v134
    %v153 = vunpack.c.l.b16 %v113
    %v154 = vunpack.c.l.b16 %v114
    %v155 = vunpack.c.l.b16 %v115
    %v156 = vunpack.c.l.b16 %v116
    %v157 = vunpack.c.l.b16 %v117
    %v158 = vunpack.c.l.b16 %v118
    %v159 = vunpack.c.l.b16 %v119
    %v160 = vunpack.c.l.b16 %v120
    %v161 = vunpack.c.l.b16 %v121
    %v162 = vunpack.c.l.b16 %v122
    %v163 = vunpack.c.l.b16 %v123
    %v164 = vunpack.c.l.b16 %v124
    %v165 = vunpack.c.l.b16 %v125
    %v166 = vunpack.c.l.b16 %v126
    %v167 = vunpack.c.l.b16 %v127
    %v168 = vunpack.c.l.b16 %v128
    %v169 = vpack.c.b16 %v154, %v153
    %v170 = vpack.c.b16 %v156, %v155
    %v171 = vpack.c.b16 %v158, %v157
    %v172 = vpack.c.b16 %v160, %v159
    %v173 = vpack.c.b16 %v162, %v161
    %v174 = vpack.c.b16 %v164, %v163
    %v175 = vpack.c.b16 %v166, %v165
    %v176 = vpack.c.b16 %v168, %v167
    %185 = vmatprep.subr.bf16.mxu0 0
    %186 = vmatpush1.bf16.msra.mxu0 %v169
    %187 = vmatprep.subr.bf16.mxu0 0
    %188 = vmatpush1.bf16.msra.mxu0 %v170
    %189 = vmatprep.subr.bf16.mxu0 0
    %190 = vmatpush1.bf16.msra.mxu0 %v171
    %191 = vmatprep.subr.bf16.mxu0 0
    %192 = vmatpush1.bf16.msra.mxu0 %v172
    %193 = vmatprep.subr.bf16.mxu0 0
    %194 = vmatpush1.bf16.msra.mxu0 %v173
    %195 = vmatprep.subr.bf16.mxu0 0
    %196 = vmatpush1.bf16.msra.mxu0 %v174
    %197 = vmatprep.subr.bf16.mxu0 0
    %198 = vmatpush1.bf16.msra.mxu0 %v175
    %199 = vmatprep.subr.bf16.mxu0 0
    %200 = vmatpush1.bf16.msra.mxu0 %v176
    %201 = vmatprep.subr.bf16.mxu0 0
    %202 = vmatpush1.bf16.msra.mxu0 0
    %203 = vmatprep.subr.bf16.mxu0 0
    %204 = vmatpush1.bf16.msra.mxu0 0
    %205 = vmatprep.subr.bf16.mxu0 0
    %206 = vmatpush1.bf16.msra.mxu0 0
    %207 = vmatprep.subr.bf16.mxu0 0
    %208 = vmatpush1.bf16.msra.mxu0 0
    %209 = vmatprep.subr.bf16.mxu0 0
    %210 = vmatpush1.bf16.msra.mxu0 0
    %211 = vmatprep.subr.bf16.mxu0 0
    %212 = vmatpush1.bf16.msra.mxu0 0
    %213 = vmatprep.subr.bf16.mxu0 0
    %214 = vmatpush1.bf16.msra.mxu0 0
    %215 = vmatprep.subr.bf16.mxu0 0
    %216 = vmatpush1.bf16.msra.mxu0 0
    %217 = vmatprep.mubr.bf16.mxu0 0
    %218 = vmatmul.mubr.bf16.gmra.mrb[0].mxu0 %v129
    %v219 = vpop.f32.mrb[0].mxu0
    %v220 = vadd.f32 %v135, %v219
    %v221 = vpop.f32.mrb[0].mxu0
    %v222 = vpop.f32.mrb[0].mxu0
    %v223 = vpop.f32.mrb[0].mxu0
    %224 = vdwg.mxu0
    %v225 = vtanh.pop %v220
    %v226 = vld [vmem:[%s1] sm:$0xff]
    %v227 = vld [vmem:[%s1 + $0x8] sm:$0xff]
    %v228 = vld [vmem:[%s1 + $0x10] sm:$0xff]
    %v229 = vld [vmem:[%s1 + $0x18] sm:$0xff]
    %v230 = vld [vmem:[%s1 + $0x20] sm:$0xff]
    %v231 = vld [vmem:[%s1 + $0x28] sm:$0xff]
    %v232 = vld [vmem:[%s1 + $0x30] sm:$0xff]
    %v233 = vld [vmem:[%s1 + $0x38] sm:$0xff]
    %v234 = vld [vmem:[%s4] sm:$0xf]
    %v235 = vld [vmem:[%s4 + $0x4] sm:$0xf]
    %v236 = vld [vmem:[%s4 + $0x8] sm:$0xf]
    %v237 = vld [vmem:[%s4 + $0xc] sm:$0xf]
    %v238 = vld [vmem:[%s4 + $0x10] sm:$0xf]
    %v239 = vld [vmem:[%s4 + $0x14] sm:$0xf]
    %v240 = vld [vmem:[%s4 + $0x18] sm:$0xf]
    %v241 = vld [vmem:[%s4 + $0x1c] sm:$0xf]
    %v242 = vld [vmem:[%s4 + $0x20] sm:$0xf]
    %v243 = vld [vmem:[%s4 + $0x24] sm:$0xf]
    %v244 = vld [vmem:[%s4 + $0x28] sm:$0xf]
    %v245 = vld [vmem:[%s4 + $0x2c] sm:$0xf]
    %v246 = vld [vmem:[%s4 + $0x30] sm:$0xf]
    %v247 = vld [vmem:[%s4 + $0x34] sm:$0xf]
    %v248 = vld [vmem:[%s4 + $0x38] sm:$0xf]
    %v249 = vld [vmem:[%s4 + $0x3c] sm:$0xf]
    %v250 = vpack.c.bf16 %v227, %v226
    %v251 = vpack.c.bf16 %v229, %v228
    %v252 = vpack.c.bf16 %v231, %v230
    %v253 = vpack.c.bf16 %v233, %v232
    %v254 = vld [vmem:[#allocation2] sm:$0x1]
    %v256 = vlaneseq
    %v257 = vshrl.u32 %v256, 7
    %v258 = vsub.s32 0, %v257
    %v259 = vrot.slane %v254, %v258
    %v277 = vunpack.c.l.b16 %v234
    %v278 = vunpack.c.l.b16 %v235
    %v279 = vunpack.c.l.b16 %v236
    %v280 = vunpack.c.l.b16 %v237
    %v281 = vunpack.c.l.b16 %v238
    %v282 = vunpack.c.l.b16 %v239
    %v283 = vunpack.c.l.b16 %v240
    %v284 = vunpack.c.l.b16 %v241
    %v285 = vunpack.c.l.b16 %v242
    %v286 = vunpack.c.l.b16 %v243
    %v287 = vunpack.c.l.b16 %v244
    %v288 = vunpack.c.l.b16 %v245
    %v289 = vunpack.c.l.b16 %v246
    %v290 = vunpack.c.l.b16 %v247
    %v291 = vunpack.c.l.b16 %v248
    %v292 = vunpack.c.l.b16 %v249
    %v293 = vpack.c.b16 %v278, %v277
    %v294 = vpack.c.b16 %v280, %v279
    %v295 = vpack.c.b16 %v282, %v281
    %v296 = vpack.c.b16 %v284, %v283
    %v297 = vpack.c.b16 %v286, %v285
    %v298 = vpack.c.b16 %v288, %v287
    %v299 = vpack.c.b16 %v290, %v289
    %v300 = vpack.c.b16 %v292, %v291
    %309 = vmatprep.subr.bf16.mxu0 0
    %310 = vmatpush1.bf16.msra.mxu0 %v293
    %311 = vmatprep.subr.bf16.mxu0 0
    %312 = vmatpush1.bf16.msra.mxu0 %v294
    %313 = vmatprep.subr.bf16.mxu0 0
    %314 = vmatpush1.bf16.msra.mxu0 %v295
    %315 = vmatprep.subr.bf16.mxu0 0
    %316 = vmatpush1.bf16.msra.mxu0 %v296
    %317 = vmatprep.subr.bf16.mxu0 0
    %318 = vmatpush1.bf16.msra.mxu0 %v297
    %319 = vmatprep.subr.bf16.mxu0 0
    %320 = vmatpush1.bf16.msra.mxu0 %v298
    %321 = vmatprep.subr.bf16.mxu0 0
    %322 = vmatpush1.bf16.msra.mxu0 %v299
    %323 = vmatprep.subr.bf16.mxu0 0
    %324 = vmatpush1.bf16.msra.mxu0 %v300
    %325 = vmatprep.subr.bf16.mxu0 0
    %326 = vmatpush1.bf16.msra.mxu0 0
    %327 = vmatprep.subr.bf16.mxu0 0
    %328 = vmatpush1.bf16.msra.mxu0 0
    %329 = vmatprep.subr.bf16.mxu0 0
    %330 = vmatpush1.bf16.msra.mxu0 0
    %331 = vmatprep.subr.bf16.mxu0 0
    %332 = vmatpush1.bf16.msra.mxu0 0
    %333 = vmatprep.subr.bf16.mxu0 0
    %334 = vmatpush1.bf16.msra.mxu0 0
    %335 = vmatprep.subr.bf16.mxu0 0
    %336 = vmatpush1.bf16.msra.mxu0 0
    %337 = vmatprep.subr.bf16.mxu0 0
    %338 = vmatpush1.bf16.msra.mxu0 0
    %339 = vmatprep.subr.bf16.mxu0 0
    %340 = vmatpush1.bf16.msra.mxu0 0
    %341 = vmatprep.mubr.bf16.mxu0 0
    %342 = vmatmul.mubr.bf16.gmra.mrb[0].mxu0 %v250
    %v343 = vpop.f32.mrb[0].mxu0
    %v344 = vadd.f32 %v259, %v343
    %v345 = vpop.f32.mrb[0].mxu0
    %v346 = vpop.f32.mrb[0].mxu0
    %v347 = vadd.f32 %v259, %v346
    %v348 = vpop.f32.mrb[0].mxu0
    %349 = vmatprep.mubr.bf16.mxu0 0
    %350 = vmatmul.mubr.bf16.gmra.mrb[0].mxu0 %v251
    %v351 = vpop.f32.mrb[0].mxu0
    %v352 = vadd.f32 %v259, %v351
    %v353 = vpop.f32.mrb[0].mxu0
    %v354 = vpop.f32.mrb[0].mxu0
    %v355 = vadd.f32 %v259, %v354
    %v356 = vpop.f32.mrb[0].mxu0
    %357 = vmatprep.mubr.bf16.mxu0 0
    %358 = vmatmul.mubr.bf16.gmra.mrb[0].mxu0 %v252
    %v359 = vpop.f32.mrb[0].mxu0
    %v360 = vadd.f32 %v259, %v359
    %v361 = vpop.f32.mrb[0].mxu0
    %v362 = vpop.f32.mrb[0].mxu0
    %v363 = vadd.f32 %v259, %v362
    %v364 = vpop.f32.mrb[0].mxu0
    %365 = vmatprep.mubr.bf16.mxu0 0
    %366 = vmatmul.mubr.bf16.gmra.mrb[0].mxu0 %v253
    %v367 = vpop.f32.mrb[0].mxu0
    %v368 = vadd.f32 %v259, %v367
    %v369 = vpop.f32.mrb[0].mxu0
    %v370 = vpop.f32.mrb[0].mxu0
    %v371 = vadd.f32 %v259, %v370
    %v372 = vpop.f32.mrb[0].mxu0
    %373 = vdwg.mxu0
    %v374 = vtanh.pop %v344
    %v375 = vtanh.pop %v347
    %v376 = vtanh.pop %v352
    %v377 = vtanh.pop %v355
    %v378 = vtanh.pop %v360
    %v379 = vtanh.pop %v363
    %v380 = vtanh.pop %v368
    %v381 = vtanh.pop %v371
    %v382 = vld [vmem:[%s6] sm:$0xf]
    %v383 = vld [vmem:[%s6 + $0x4] sm:$0xf]
    %v384 = vld [vmem:[%s6 + $0x8] sm:$0xf]
    %v385 = vld [vmem:[%s6 + $0xc] sm:$0xf]
    %v386 = vpack.c.bf16 %v375, %v374
    %v387 = vpack.c.bf16 %v377, %v376
    %v388 = vpack.c.bf16 %v379, %v378
    %v389 = vpack.c.bf16 %v381, %v380
    %v390 = vld [vmem:[#allocation4] sm:$0x1]
    %v392 = vlaneseq
    %v393 = vshrl.u32 %v392, 7
    %v394 = vsub.s32 0, %v393
    %v395 = vrot.slane %v390, %v394
    %v401 = vunpack.c.l.b16 %v382
    %v402 = vunpack.c.l.b16 %v383
    %v403 = vunpack.c.l.b16 %v384
    %v404 = vunpack.c.l.b16 %v385
    %v405 = vpack.c.b16 %v402, %v401
    %v406 = vpack.c.b16 %v404, %v403
    %vm409 = vcmask 261120
    %v411 = vsel %vm409, %v386, 0
    %v414 = vsel %vm409, %v387, 0
    %v417 = vsel %vm409, %v388, 0
    %v420 = vsel %vm409, %v389, 0
    %422 = vmatprep.subr.bf16.mxu0 0
    %423 = vmatpush1.bf16.msra.mxu0 %v405
    %424 = vmatprep.subr.bf16.mxu0 0
    %425 = vmatpush1.bf16.msra.mxu0 %v406
    %426 = vmatprep.subr.bf16.mxu0 0
    %427 = vmatpush1.bf16.msra.mxu0 0
    %428 = vmatprep.subr.bf16.mxu0 0
    %429 = vmatpush1.bf16.msra.mxu0 0
    %430 = vmatprep.subr.bf16.mxu0 0
    %431 = vmatpush1.bf16.msra.mxu0 0
    %432 = vmatprep.subr.bf16.mxu0 0
    %433 = vmatpush1.bf16.msra.mxu0 0
    %434 = vmatprep.subr.bf16.mxu0 0
    %435 = vmatpush1.bf16.msra.mxu0 0
    %436 = vmatprep.subr.bf16.mxu0 0
    %437 = vmatpush1.bf16.msra.mxu0 0
    %438 = vmatprep.subr.bf16.mxu0 0
    %439 = vmatpush1.bf16.msra.mxu0 0
    %440 = vmatprep.subr.bf16.mxu0 0
    %441 = vmatpush1.bf16.msra.mxu0 0
    %442 = vmatprep.subr.bf16.mxu0 0
    %443 = vmatpush1.bf16.msra.mxu0 0
    %444 = vmatprep.subr.bf16.mxu0 0
    %445 = vmatpush1.bf16.msra.mxu0 0
    %446 = vmatprep.subr.bf16.mxu0 0
    %447 = vmatpush1.bf16.msra.mxu0 0
    %448 = vmatprep.subr.bf16.mxu0 0
    %449 = vmatpush1.bf16.msra.mxu0 0
    %450 = vmatprep.subr.bf16.mxu0 0
    %451 = vmatpush1.bf16.msra.mxu0 0
    %452 = vmatprep.subr.bf16.mxu0 0
    %453 = vmatpush1.bf16.msra.mxu0 0
    %454 = vmatprep.mubr.bf16.mxu0 0
    %455 = vmatmul.mubr.bf16.gmra.mrb[0].mxu0 %v411
    %v456 = vpop.f32.mrb[0].mxu0
    %v457 = vadd.f32 %v395, %v456
    %v458 = vpop.f32.mrb[0].mxu0
    %v459 = vpop.f32.mrb[0].mxu0
    %v460 = vadd.f32 %v395, %v459
    %v461 = vpop.f32.mrb[0].mxu0
    %462 = vmatprep.mubr.bf16.mxu0 0
    %463 = vmatmul.mubr.bf16.gmra.mrb[0].mxu0 %v414
    %v464 = vpop.f32.mrb[0].mxu0
    %v465 = vadd.f32 %v395, %v464
    %v466 = vpop.f32.mrb[0].mxu0
    %v467 = vpop.f32.mrb[0].mxu0
    %v468 = vadd.f32 %v395, %v467
    %v469 = vpop.f32.mrb[0].mxu0
    %470 = vmatprep.mubr.bf16.mxu0 0
    %471 = vmatmul.mubr.bf16.gmra.mrb[0].mxu0 %v417
    %v472 = vpop.f32.mrb[0].mxu0
    %v473 = vadd.f32 %v395, %v472
    %v474 = vpop.f32.mrb[0].mxu0
    %v475 = vpop.f32.mrb[0].mxu0
    %v476 = vadd.f32 %v395, %v475
    %v477 = vpop.f32.mrb[0].mxu0
    %478 = vmatprep.mubr.bf16.mxu0 0
    %479 = vmatmul.mubr.bf16.gmra.mrb[0].mxu0 %v420
    %v480 = vpop.f32.mrb[0].mxu0
    %v481 = vadd.f32 %v395, %v480
    %v482 = vpop.f32.mrb[0].mxu0
    %v483 = vpop.f32.mrb[0].mxu0
    %v484 = vadd.f32 %v395, %v483
    %v485 = vpop.f32.mrb[0].mxu0
    %486 = vdwg.mxu0
    %v487 = vld [vmem:[%s7] sm:$0xf]
    %v488 = vld [vmem:[%s7 + $0x4] sm:$0xf]
    %v489 = vld [vmem:[%s7 + $0x8] sm:$0xf]
    %v490 = vld [vmem:[%s7 + $0xc] sm:$0xf]
    %v491 = vld [vmem:[%s9] sm:$0xf]
    %v492 = vld [vmem:[%s9 + $0x4] sm:$0xf]
    %v493 = vld [vmem:[%s9 + $0x8] sm:$0xf]
    %v494 = vld [vmem:[%s9 + $0xc] sm:$0xf]
    %v495 = vld [vmem:[%s10] sm:$0xf]
    %v496 = vld [vmem:[%s10 + $0x4] sm:$0xf]
    %v497 = vld [vmem:[%s10 + $0x8] sm:$0xf]
    %v498 = vld [vmem:[%s10 + $0xc] sm:$0xf]
    %v499 = vld [vmem:[#allocation6] sm:$0x1]
    %v504 = vunpack.c.l.b16 %v487
    %v505 = vunpack.c.l.b16 %v488
    %v506 = vunpack.c.l.b16 %v489
    %v507 = vunpack.c.l.b16 %v490
    %v508 = vpack.c.b16 %v505, %v504
    %v509 = vpack.c.b16 %v507, %v506
    %v513 = vsel %vm409, 0, 0
    %515 = vmatprep.subr.bf16.mxu0 0
    %516 = vmatpush1.bf16.msra.mxu0 %v508
    %517 = vmatprep.subr.bf16.mxu0 0
    %518 = vmatpush1.bf16.msra.mxu0 %v509
    %519 = vmatprep.subr.bf16.mxu0 0
    %520 = vmatpush1.bf16.msra.mxu0 0
    %521 = vmatprep.subr.bf16.mxu0 0
    %522 = vmatpush1.bf16.msra.mxu0 0
    %523 = vmatprep.subr.bf16.mxu0 0
    %524 = vmatpush1.bf16.msra.mxu0 0
    %525 = vmatprep.subr.bf16.mxu0 0
    %526 = vmatpush1.bf16.msra.mxu0 0
    %527 = vmatprep.subr.bf16.mxu0 0
    %528 = vmatpush1.bf16.msra.mxu0 0
    %529 = vmatprep.subr.bf16.mxu0 0
    %530 = vmatpush1.bf16.msra.mxu0 0
    %531 = vmatprep.subr.bf16.mxu0 0
    %532 = vmatpush1.bf16.msra.mxu0 0
    %533 = vmatprep.subr.bf16.mxu0 0
    %534 = vmatpush1.bf16.msra.mxu0 0
    %535 = vmatprep.subr.bf16.mxu0 0
    %536 = vmatpush1.bf16.msra.mxu0 0
    %537 = vmatprep.subr.bf16.mxu0 0
    %538 = vmatpush1.bf16.msra.mxu0 0
    %539 = vmatprep.subr.bf16.mxu0 0
    %540 = vmatpush1.bf16.msra.mxu0 0
    %541 = vmatprep.subr.bf16.mxu0 0
    %542 = vmatpush1.bf16.msra.mxu0 0
    %543 = vmatprep.subr.bf16.mxu0 0
    %544 = vmatpush1.bf16.msra.mxu0 0
    %545 = vmatprep.subr.bf16.mxu0 0
    %546 = vmatpush1.bf16.msra.mxu0 0
    %547 = vmatprep.mubr.bf16.mxu0 0
    %548 = vmatmul.mubr.bf16.gmra.mrb[0].mxu0 %v513
    %v549 = vpop.f32.mrb[0].mxu0
    %v550 = vadd.f32 0.0, %v549
    %v551 = vpop.f32.mrb[0].mxu0
    %v552 = vpop.f32.mrb[0].mxu0
    %v553 = vpop.f32.mrb[0].mxu0
    %554 = vdwg.mxu0
    %v555 = vadd.f32 %v457, %v550
    %v556 = vxor.u32 %v555, 2147483648
    %v557 = vmul.f32 %v556, 1.442695
    %v558 = vpow.pop %v557
    %v559 = vadd.f32 %v558, 1.0
    %v560 = vrcp.pop %v559
    %v561 = vmul.f32 1.0, %v560
    %v562 = vtanh.pop %v555
    %v563 = vmul.f32 %v561, 0.0
    %565 = vrot.lane.b32.xlu0 %v562, 64
    %v566 = vpop.permute.xlu0 %565
    %v568 = vmul.f32 %v561, %v566
    %570 = vrot.lane.b32.xlu0 %v568, 32
    %v571 = vpop.permute.xlu0 %570
    %v573 = vadd.f32 %v563, %v571
    %v574 = vtanh.pop %v573
    %576 = vrot.lane.b32.xlu0 %v574, 64
    %v577 = vpop.permute.xlu0 %576
    %v579 = vmul.f32 %v561, %v577
    %v580 = vpack.c.bf16 %v579, %v579
    %v585 = vunpack.c.l.b16 %v495
    %v586 = vunpack.c.l.b16 %v496
    %v587 = vunpack.c.l.b16 %v497
    %v588 = vunpack.c.l.b16 %v498
    %v589 = vpack.c.b16 %v586, %v585
    %v590 = vpack.c.b16 %v588, %v587
    %593 = vmatprep.subr.bf16.mxu0 0
    %594 = vmatpush1.bf16.msra.mxu0 %v589
    %595 = vmatprep.subr.bf16.mxu0 0
    %596 = vmatpush1.bf16.msra.mxu0 %v590
    %597 = vmatprep.subr.bf16.mxu0 0
    %598 = vmatpush1.bf16.msra.mxu0 0
    %599 = vmatprep.subr.bf16.mxu0 0
    %600 = vmatpush1.bf16.msra.mxu0 0
    %601 = vmatprep.subr.bf16.mxu0 0
    %602 = vmatpush1.bf16.msra.mxu0 0
    %603 = vmatprep.subr.bf16.mxu0 0
    %604 = vmatpush1.bf16.msra.mxu0 0
    %605 = vmatprep.subr.bf16.mxu0 0
    %606 = vmatpush1.bf16.msra.mxu0 0
    %607 = vmatprep.subr.bf16.mxu0 0
    %608 = vmatpush1.bf16.msra.mxu0 0
    %609 = vmatprep.subr.bf16.mxu0 0
    %610 = vmatpush1.bf16.msra.mxu0 0
    %611 = vmatprep.subr.bf16.mxu0 0
    %612 = vmatpush1.bf16.msra.mxu0 0
    %613 = vmatprep.subr.bf16.mxu0 0
    %614 = vmatpush1.bf16.msra.mxu0 0
    %615 = vmatprep.subr.bf16.mxu0 0
    %616 = vmatpush1.bf16.msra.mxu0 0
    %617 = vmatprep.subr.bf16.mxu0 0
    %618 = vmatpush1.bf16.msra.mxu0 0
    %619 = vmatprep.subr.bf16.mxu0 0
    %620 = vmatpush1.bf16.msra.mxu0 0
    %621 = vmatprep.subr.bf16.mxu0 0
    %622 = vmatpush1.bf16.msra.mxu0 0
    %623 = vmatprep.subr.bf16.mxu0 0
    %624 = vmatpush1.bf16.msra.mxu0 0
    %625 = vmatprep.mubr.bf16.mxu0 0
    %626 = vmatmul.mubr.bf16.gmra.mrb[0].mxu0 %v513
    %v627 = vpop.f32.mrb[0].mxu0
    %v628 = vadd.f32 0.0, %v627
    %v629 = vpop.f32.mrb[0].mxu0
    %v630 = vpop.f32.mrb[0].mxu0
    %v631 = vpop.f32.mrb[0].mxu0
    %632 = vdwg.mxu0
    %634 = vrot.lane.b32.xlu0 %v580, 32
    %v635 = vpop.permute.xlu0 %634
    %v640 = vunpack.c.l.b16 %v491
    %v641 = vunpack.c.l.b16 %v492
    %v642 = vunpack.c.l.b16 %v493
    %v643 = vunpack.c.l.b16 %v494
    %v644 = vpack.c.b16 %v641, %v640
    %v645 = vpack.c.b16 %v643, %v642
    %v649 = vsel %vm409, %v635, 0
    %651 = vmatprep.subr.bf16.mxu0 0
    %652 = vmatpush1.bf16.msra.mxu0 %v644
    %653 = vmatprep.subr.bf16.mxu0 0
    %654 = vmatpush1.bf16.msra.mxu0 %v645
    %655 = vmatprep.subr.bf16.mxu0 0
    %656 = vmatpush1.bf16.msra.mxu0 0
    %657 = vmatprep.subr.bf16.mxu0 0
    %658 = vmatpush1.bf16.msra.mxu0 0
    %659 = vmatprep.subr.bf16.mxu0 0
    %660 = vmatpush1.bf16.msra.mxu0 0
    %661 = vmatprep.subr.bf16.mxu0 0
    %662 = vmatpush1.bf16.msra.mxu0 0
    %663 = vmatprep.subr.bf16.mxu0 0
    %664 = vmatpush1.bf16.msra.mxu0 0
    %665 = vmatprep.subr.bf16.mxu0 0
    %666 = vmatpush1.bf16.msra.mxu0 0
    %667 = vmatprep.subr.bf16.mxu0 0
    %668 = vmatpush1.bf16.msra.mxu0 0
    %669 = vmatprep.subr.bf16.mxu0 0
    %670 = vmatpush1.bf16.msra.mxu0 0
    %671 = vmatprep.subr.bf16.mxu0 0
    %672 = vmatpush1.bf16.msra.mxu0 0
    %673 = vmatprep.subr.bf16.mxu0 0
    %674 = vmatpush1.bf16.msra.mxu0 0
    %675 = vmatprep.subr.bf16.mxu0 0
    %676 = vmatpush1.bf16.msra.mxu0 0
    %677 = vmatprep.subr.bf16.mxu0 0
    %678 = vmatpush1.bf16.msra.mxu0 0
    %679 = vmatprep.subr.bf16.mxu0 0
    %680 = vmatpush1.bf16.msra.mxu0 0
    %681 = vmatprep.subr.bf16.mxu0 0
    %682 = vmatpush1.bf16.msra.mxu0 0
    %683 = vmatprep.mubr.bf16.mxu0 0
    %684 = vmatmul.mubr.bf16.gmra.mrb[0].mxu0 %v649
    %v685 = vpop.f32.mrb[0].mxu0
    %v686 = vadd.f32 %v628, %v685
    %v687 = vpop.f32.mrb[0].mxu0
    %v688 = vpop.f32.mrb[0].mxu0
    %v689 = vpop.f32.mrb[0].mxu0
    %690 = vdwg.mxu0
    %v692 = vlaneseq
    %v693 = vshrl.u32 %v692, 7
    %v694 = vsub.s32 0, %v693
    %v695 = vrot.slane %v499, %v694
    %v697 = vadd.f32 %v686, %v695
    %v698 = vxor.u32 %v697, 2147483648
    %v699 = vmul.f32 %v698, 1.442695
    %v700 = vpow.pop %v699
    %v701 = vadd.f32 %v700, 1.0
    %v702 = vrcp.pop %v701
    %v703 = vmul.f32 1.0, %v702
    %v704 = vtanh.pop %v697
    %v705 = vmul.f32 %v703, 0.0
    %707 = vrot.lane.b32.xlu0 %v704, 64
    %v708 = vpop.permute.xlu0 %707
    %v710 = vmul.f32 %v703, %v708
    %712 = vrot.lane.b32.xlu0 %v710, 32
    %v713 = vpop.permute.xlu0 %712
    %v715 = vadd.f32 %v705, %v713
    %v716 = vtanh.pop %v715
    %718 = vrot.lane.b32.xlu0 %v716, 64
    %v719 = vpop.permute.xlu0 %718
    %v721 = vmul.f32 %v703, %v719
    %722 = vmatprep.subr.bf16.mxu0 0
    %723 = vmatpush1.bf16.msra.mxu0 %v508
    %724 = vmatprep.subr.bf16.mxu0 0
    %725 = vmatpush1.bf16.msra.mxu0 %v509
    %726 = vmatprep.subr.bf16.mxu0 0
    %727 = vmatpush1.bf16.msra.mxu0 0
    %728 = vmatprep.subr.bf16.mxu0 0
    %729 = vmatpush1.bf16.msra.mxu0 0
    %730 = vmatprep.subr.bf16.mxu0 0
    %731 = vmatpush1.bf16.msra.mxu0 0
    %732 = vmatprep.subr.bf16.mxu0 0
    %733 = vmatpush1.bf16.msra.mxu0 0
    %734 = vmatprep.subr.bf16.mxu0 0
    %735 = vmatpush1.bf16.msra.mxu0 0
    %736 = vmatprep.subr.bf16.mxu0 0
    %737 = vmatpush1.bf16.msra.mxu0 0
    %738 = vmatprep.subr.bf16.mxu0 0
    %739 = vmatpush1.bf16.msra.mxu0 0
    %740 = vmatprep.subr.bf16.mxu0 0
    %741 = vmatpush1.bf16.msra.mxu0 0
    %742 = vmatprep.subr.bf16.mxu0 0
    %743 = vmatpush1.bf16.msra.mxu0 0
    %744 = vmatprep.subr.bf16.mxu0 0
    %745 = vmatpush1.bf16.msra.mxu0 0
    %746 = vmatprep.subr.bf16.mxu0 0
    %747 = vmatpush1.bf16.msra.mxu0 0
    %748 = vmatprep.subr.bf16.mxu0 0
    %749 = vmatpush1.bf16.msra.mxu0 0
    %750 = vmatprep.subr.bf16.mxu0 0
    %751 = vmatpush1.bf16.msra.mxu0 0
    %752 = vmatprep.subr.bf16.mxu0 0
    %753 = vmatpush1.bf16.msra.mxu0 0
    %754 = vmatprep.mubr.bf16.mxu0 0
    %755 = vmatmul.mubr.bf16.gmra.mrb[0].mxu0 %v649
    %v756 = vpop.f32.mrb[0].mxu0
    %v757 = vadd.f32 0.0, %v756
    %v758 = vpop.f32.mrb[0].mxu0
    %v759 = vpop.f32.mrb[0].mxu0
    %v760 = vpop.f32.mrb[0].mxu0
    %761 = vdwg.mxu0
    %v762 = vadd.f32 %v460, %v757
    %v763 = vxor.u32 %v762, 2147483648
    %v764 = vmul.f32 %v763, 1.442695
    %v765 = vpow.pop %v764
    %v766 = vadd.f32 %v765, 1.0
    %v767 = vrcp.pop %v766
    %v768 = vmul.f32 1.0, %v767
    %v769 = vtanh.pop %v762
    %v770 = vmul.f32 %v768, %v573
    %772 = vrot.lane.b32.xlu0 %v769, 64
    %v773 = vpop.permute.xlu0 %772
    %v775 = vmul.f32 %v768, %v773
    %777 = vrot.lane.b32.xlu0 %v775, 32
    %v778 = vpop.permute.xlu0 %777
    %v780 = vadd.f32 %v770, %v778
    %v781 = vtanh.pop %v780
    %783 = vrot.lane.b32.xlu0 %v781, 64
    %v784 = vpop.permute.xlu0 %783
    %v786 = vmul.f32 %v768, %v784
    %v787 = vpack.c.bf16 %v786, %v786
    %v788 = vpack.c.bf16 %v721, %v721
    %790 = vrot.lane.b32.xlu0 %v788, 32
    %v791 = vpop.permute.xlu0 %790
    %v793 = vsel %vm409, %v791, 0
    %795 = vmatprep.subr.bf16.mxu0 0
    %796 = vmatpush1.bf16.msra.mxu0 %v589
    %797 = vmatprep.subr.bf16.mxu0 0
    %798 = vmatpush1.bf16.msra.mxu0 %v590
    %799 = vmatprep.subr.bf16.mxu0 0
    %800 = vmatpush1.bf16.msra.mxu0 0
    %801 = vmatprep.subr.bf16.mxu0 0
    %802 = vmatpush1.bf16.msra.mxu0 0
    %803 = vmatprep.subr.bf16.mxu0 0
    %804 = vmatpush1.bf16.msra.mxu0 0
    %805 = vmatprep.subr.bf16.mxu0 0
    %806 = vmatpush1.bf16.msra.mxu0 0
    %807 = vmatprep.subr.bf16.mxu0 0
    %808 = vmatpush1.bf16.msra.mxu0 0
    %809 = vmatprep.subr.bf16.mxu0 0
    %810 = vmatpush1.bf16.msra.mxu0 0
    %811 = vmatprep.subr.bf16.mxu0 0
    %812 = vmatpush1.bf16.msra.mxu0 0
    %813 = vmatprep.subr.bf16.mxu0 0
    %814 = vmatpush1.bf16.msra.mxu0 0
    %815 = vmatprep.subr.bf16.mxu0 0
    %816 = vmatpush1.bf16.msra.mxu0 0
    %817 = vmatprep.subr.bf16.mxu0 0
    %818 = vmatpush1.bf16.msra.mxu0 0
    %819 = vmatprep.subr.bf16.mxu0 0
    %820 = vmatpush1.bf16.msra.mxu0 0
    %821 = vmatprep.subr.bf16.mxu0 0
    %822 = vmatpush1.bf16.msra.mxu0 0
    %823 = vmatprep.subr.bf16.mxu0 0
    %824 = vmatpush1.bf16.msra.mxu0 0
    %825 = vmatprep.subr.bf16.mxu0 0
    %826 = vmatpush1.bf16.msra.mxu0 0
    %827 = vmatprep.mubr.bf16.mxu0 0
    %828 = vmatmul.mubr.bf16.gmra.mrb[0].mxu0 %v793
    %v829 = vpop.f32.mrb[0].mxu0
    %v830 = vadd.f32 0.0, %v829
    %v831 = vpop.f32.mrb[0].mxu0
    %v832 = vpop.f32.mrb[0].mxu0
    %v833 = vpop.f32.mrb[0].mxu0
    %834 = vdwg.mxu0
    %836 = vrot.lane.b32.xlu0 %v787, 32
    %v837 = vpop.permute.xlu0 %836
    %v839 = vsel %vm409, %v837, 0
    %841 = vmatprep.subr.bf16.mxu0 0
    %842 = vmatpush1.bf16.msra.mxu0 %v644
    %843 = vmatprep.subr.bf16.mxu0 0
    %844 = vmatpush1.bf16.msra.mxu0 %v645
    %845 = vmatprep.subr.bf16.mxu0 0
    %846 = vmatpush1.bf16.msra.mxu0 0
    %847 = vmatprep.subr.bf16.mxu0 0
    %848 = vmatpush1.bf16.msra.mxu0 0
    %849 = vmatprep.subr.bf16.mxu0 0
    %850 = vmatpush1.bf16.msra.mxu0 0
    %851 = vmatprep.subr.bf16.mxu0 0
    %852 = vmatpush1.bf16.msra.mxu0 0
    %853 = vmatprep.subr.bf16.mxu0 0
    %854 = vmatpush1.bf16.msra.mxu0 0
    %855 = vmatprep.subr.bf16.mxu0 0
    %856 = vmatpush1.bf16.msra.mxu0 0
    %857 = vmatprep.subr.bf16.mxu0 0
    %858 = vmatpush1.bf16.msra.mxu0 0
    %859 = vmatprep.subr.bf16.mxu0 0
    %860 = vmatpush1.bf16.msra.mxu0 0
    %861 = vmatprep.subr.bf16.mxu0 0
    %862 = vmatpush1.bf16.msra.mxu0 0
    %863 = vmatprep.subr.bf16.mxu0 0
    %864 = vmatpush1.bf16.msra.mxu0 0
    %865 = vmatprep.subr.bf16.mxu0 0
    %866 = vmatpush1.bf16.msra.mxu0 0
    %867 = vmatprep.subr.bf16.mxu0 0
    %868 = vmatpush1.bf16.msra.mxu0 0
    %869 = vmatprep.subr.bf16.mxu0 0
    %870 = vmatpush1.bf16.msra.mxu0 0
    %871 = vmatprep.subr.bf16.mxu0 0
    %872 = vmatpush1.bf16.msra.mxu0 0
    %873 = vmatprep.mubr.bf16.mxu0 0
    %874 = vmatmul.mubr.bf16.gmra.mrb[0].mxu0 %v839
    %v875 = vpop.f32.mrb[0].mxu0
    %v876 = vadd.f32 %v830, %v875
    %v877 = vpop.f32.mrb[0].mxu0
    %v878 = vpop.f32.mrb[0].mxu0
    %v879 = vpop.f32.mrb[0].mxu0
    %880 = vdwg.mxu0
    %v881 = vadd.f32 %v876, %v695
    %v882 = vxor.u32 %v881, 2147483648
    %v883 = vmul.f32 %v882, 1.442695
    %v884 = vpow.pop %v883
    %v885 = vadd.f32 %v884, 1.0
    %v886 = vrcp.pop %v885
    %v887 = vmul.f32 1.0, %v886
    %v888 = vtanh.pop %v881
    %v889 = vmul.f32 %v887, %v715
    %891 = vrot.lane.b32.xlu0 %v888, 64
    %v892 = vpop.permute.xlu0 %891
    %v894 = vmul.f32 %v887, %v892
    %896 = vrot.lane.b32.xlu0 %v894, 32
    %v897 = vpop.permute.xlu0 %896
    %v899 = vadd.f32 %v889, %v897
    %v900 = vtanh.pop %v899
    %902 = vrot.lane.b32.xlu0 %v900, 64
    %v903 = vpop.permute.xlu0 %902
    %v905 = vmul.f32 %v887, %v903
    %906 = vmatprep.subr.bf16.mxu0 0
    %907 = vmatpush1.bf16.msra.mxu0 %v508
    %908 = vmatprep.subr.bf16.mxu0 0
    %909 = vmatpush1.bf16.msra.mxu0 %v509
    %910 = vmatprep.subr.bf16.mxu0 0
    %911 = vmatpush1.bf16.msra.mxu0 0
    %912 = vmatprep.subr.bf16.mxu0 0
    %913 = vmatpush1.bf16.msra.mxu0 0
    %914 = vmatprep.subr.bf16.mxu0 0
    %915 = vmatpush1.bf16.msra.mxu0 0
    %916 = vmatprep.subr.bf16.mxu0 0
    %917 = vmatpush1.bf16.msra.mxu0 0
    %918 = vmatprep.subr.bf16.mxu0 0
    %919 = vmatpush1.bf16.msra.mxu0 0
    %920 = vmatprep.subr.bf16.mxu0 0
    %921 = vmatpush1.bf16.msra.mxu0 0
    %922 = vmatprep.subr.bf16.mxu0 0
    %923 = vmatpush1.bf16.msra.mxu0 0
    %924 = vmatprep.subr.bf16.mxu0 0
    %925 = vmatpush1.bf16.msra.mxu0 0
    %926 = vmatprep.subr.bf16.mxu0 0
    %927 = vmatpush1.bf16.msra.mxu0 0
    %928 = vmatprep.subr.bf16.mxu0 0
    %929 = vmatpush1.bf16.msra.mxu0 0
    %930 = vmatprep.subr.bf16.mxu0 0
    %931 = vmatpush1.bf16.msra.mxu0 0
    %932 = vmatprep.subr.bf16.mxu0 0
    %933 = vmatpush1.bf16.msra.mxu0 0
    %934 = vmatprep.subr.bf16.mxu0 0
    %935 = vmatpush1.bf16.msra.mxu0 0
    %936 = vmatprep.subr.bf16.mxu0 0
    %937 = vmatpush1.bf16.msra.mxu0 0
    %938 = vmatprep.mubr.bf16.mxu0 0
    %939 = vmatmul.mubr.bf16.gmra.mrb[0].mxu0 %v839
    %v940 = vpop.f32.mrb[0].mxu0
    %v941 = vadd.f32 0.0, %v940
    %v942 = vpop.f32.mrb[0].mxu0
    %v943 = vpop.f32.mrb[0].mxu0
    %v944 = vpop.f32.mrb[0].mxu0
    %945 = vdwg.mxu0
    %v946 = vadd.f32 %v465, %v941
    %v947 = vxor.u32 %v946, 2147483648
    %v948 = vmul.f32 %v947, 1.442695
    %v949 = vpow.pop %v948
    %v950 = vadd.f32 %v949, 1.0
    %v951 = vrcp.pop %v950
    %v952 = vmul.f32 1.0, %v951
    %v953 = vtanh.pop %v946
    %v954 = vmul.f32 %v952, %v780
    %956 = vrot.lane.b32.xlu0 %v953, 64
    %v957 = vpop.permute.xlu0 %956
    %v959 = vmul.f32 %v952, %v957
    %961 = vrot.lane.b32.xlu0 %v959, 32
    %v962 = vpop.permute.xlu0 %961
    %v964 = vadd.f32 %v954, %v962
    %v965 = vtanh.pop %v964
    %967 = vrot.lane.b32.xlu0 %v965, 64
    %v968 = vpop.permute.xlu0 %967
    %v970 = vmul.f32 %v952, %v968
    %v971 = vpack.c.bf16 %v970, %v970
    %v972 = vpack.c.bf16 %v905, %v905
    %974 = vrot.lane.b32.xlu0 %v972, 32
    %v975 = vpop.permute.xlu0 %974
    %v977 = vsel %vm409, %v975, 0
    %979 = vmatprep.subr.bf16.mxu0 0
    %980 = vmatpush1.bf16.msra.mxu0 %v589
    %981 = vmatprep.subr.bf16.mxu0 0
    %982 = vmatpush1.bf16.msra.mxu0 %v590
    %983 = vmatprep.subr.bf16.mxu0 0
    %984 = vmatpush1.bf16.msra.mxu0 0
    %985 = vmatprep.subr.bf16.mxu0 0
    %986 = vmatpush1.bf16.msra.mxu0 0
    %987 = vmatprep.subr.bf16.mxu0 0
    %988 = vmatpush1.bf16.msra.mxu0 0
    %989 = vmatprep.subr.bf16.mxu0 0
    %990 = vmatpush1.bf16.msra.mxu0 0
    %991 = vmatprep.subr.bf16.mxu0 0
    %992 = vmatpush1.bf16.msra.mxu0 0
    %993 = vmatprep.subr.bf16.mxu0 0
    %994 = vmatpush1.bf16.msra.mxu0 0
    %995 = vmatprep.subr.bf16.mxu0 0
    %996 = vmatpush1.bf16.msra.mxu0 0
    %997 = vmatprep.subr.bf16.mxu0 0
    %998 = vmatpush1.bf16.msra.mxu0 0
    %999 = vmatprep.subr.bf16.mxu0 0
    %1000 = vmatpush1.bf16.msra.mxu0 0
    %1001 = vmatprep.subr.bf16.mxu0 0
    %1002 = vmatpush1.bf16.msra.mxu0 0
    %1003 = vmatprep.subr.bf16.mxu0 0
    %1004 = vmatpush1.bf16.msra.mxu0 0
    %1005 = vmatprep.subr.bf16.mxu0 0
    %1006 = vmatpush1.bf16.msra.mxu0 0
    %1007 = vmatprep.subr.bf16.mxu0 0
    %1008 = vmatpush1.bf16.msra.mxu0 0
    %1009 = vmatprep.subr.bf16.mxu0 0
    %1010 = vmatpush1.bf16.msra.mxu0 0
    %1011 = vmatprep.mubr.bf16.mxu0 0
    %1012 = vmatmul.mubr.bf16.gmra.mrb[0].mxu0 %v977
    %v1013 = vpop.f32.mrb[0].mxu0
    %v1014 = vadd.f32 0.0, %v1013
    %v1015 = vpop.f32.mrb[0].mxu0
    %v1016 = vpop.f32.mrb[0].mxu0
    %v1017 = vpop.f32.mrb[0].mxu0
    %1018 = vdwg.mxu0
    %1020 = vrot.lane.b32.xlu0 %v971, 32
    %v1021 = vpop.permute.xlu0 %1020
    %v1023 = vsel %vm409, %v1021, 0
    %1025 = vmatprep.subr.bf16.mxu0 0
    %1026 = vmatpush1.bf16.msra.mxu0 %v644
    %1027 = vmatprep.subr.bf16.mxu0 0
    %1028 = vmatpush1.bf16.msra.mxu0 %v645
    %1029 = vmatprep.subr.bf16.mxu0 0
    %1030 = vmatpush1.bf16.msra.mxu0 0
    %1031 = vmatprep.subr.bf16.mxu0 0
    %1032 = vmatpush1.bf16.msra.mxu0 0
    %1033 = vmatprep.subr.bf16.mxu0 0
    %1034 = vmatpush1.bf16.msra.mxu0 0
    %1035 = vmatprep.subr.bf16.mxu0 0
    %1036 = vmatpush1.bf16.msra.mxu0 0
    %1037 = vmatprep.subr.bf16.mxu0 0
    %1038 = vmatpush1.bf16.msra.mxu0 0
    %1039 = vmatprep.subr.bf16.mxu0 0
    %1040 = vmatpush1.bf16.msra.mxu0 0
    %1041 = vmatprep.subr.bf16.mxu0 0
    %1042 = vmatpush1.bf16.msra.mxu0 0
    %1043 = vmatprep.subr.bf16.mxu0 0
    %1044 = vmatpush1.bf16.msra.mxu0 0
    %1045 = vmatprep.subr.bf16.mxu0 0
    %1046 = vmatpush1.bf16.msra.mxu0 0
    %1047 = vmatprep.subr.bf16.mxu0 0
    %1048 = vmatpush1.bf16.msra.mxu0 0
    %1049 = vmatprep.subr.bf16.mxu0 0
    %1050 = vmatpush1.bf16.msra.mxu0 0
    %1051 = vmatprep.subr.bf16.mxu0 0
    %1052 = vmatpush1.bf16.msra.mxu0 0
    %1053 = vmatprep.subr.bf16.mxu0 0
    %1054 = vmatpush1.bf16.msra.mxu0 0
    %1055 = vmatprep.subr.bf16.mxu0 0
    %1056 = vmatpush1.bf16.msra.mxu0 0
    %1057 = vmatprep.mubr.bf16.mxu0 0
    %1058 = vmatmul.mubr.bf16.gmra.mrb[0].mxu0 %v1023
    %v1059 = vpop.f32.mrb[0].mxu0
    %v1060 = vadd.f32 %v1014, %v1059
    %v1061 = vpop.f32.mrb[0].mxu0
    %v1062 = vpop.f32.mrb[0].mxu0
    %v1063 = vpop.f32.mrb[0].mxu0
    %1064 = vdwg.mxu0
    %v1065 = vadd.f32 %v1060, %v695
    %v1066 = vxor.u32 %v1065, 2147483648
    %v1067 = vmul.f32 %v1066, 1.442695
    %v1068 = vpow.pop %v1067
    %v1069 = vadd.f32 %v1068, 1.0
    %v1070 = vrcp.pop %v1069
    %v1071 = vmul.f32 1.0, %v1070
    %v1072 = vtanh.pop %v1065
    %v1073 = vmul.f32 %v1071, %v899
    %1075 = vrot.lane.b32.xlu0 %v1072, 64
    %v1076 = vpop.permute.xlu0 %1075
    %v1078 = vmul.f32 %v1071, %v1076
    %1080 = vrot.lane.b32.xlu0 %v1078, 32
    %v1081 = vpop.permute.xlu0 %1080
    %v1083 = vadd.f32 %v1073, %v1081
    %v1084 = vtanh.pop %v1083
    %1086 = vrot.lane.b32.xlu0 %v1084, 64
    %v1087 = vpop.permute.xlu0 %1086
    %v1089 = vmul.f32 %v1071, %v1087
    %1090 = vmatprep.subr.bf16.mxu0 0
    %1091 = vmatpush1.bf16.msra.mxu0 %v508
    %1092 = vmatprep.subr.bf16.mxu0 0
    %1093 = vmatpush1.bf16.msra.mxu0 %v509
    %1094 = vmatprep.subr.bf16.mxu0 0
    %1095 = vmatpush1.bf16.msra.mxu0 0
    %1096 = vmatprep.subr.bf16.mxu0 0
    %1097 = vmatpush1.bf16.msra.mxu0 0
    %1098 = vmatprep.subr.bf16.mxu0 0
    %1099 = vmatpush1.bf16.msra.mxu0 0
    %1100 = vmatprep.subr.bf16.mxu0 0
    %1101 = vmatpush1.bf16.msra.mxu0 0
    %1102 = vmatprep.subr.bf16.mxu0 0
    %1103 = vmatpush1.bf16.msra.mxu0 0
    %1104 = vmatprep.subr.bf16.mxu0 0
    %1105 = vmatpush1.bf16.msra.mxu0 0
    %1106 = vmatprep.subr.bf16.mxu0 0
    %1107 = vmatpush1.bf16.msra.mxu0 0
    %1108 = vmatprep.subr.bf16.mxu0 0
    %1109 = vmatpush1.bf16.msra.mxu0 0
    %1110 = vmatprep.subr.bf16.mxu0 0
    %1111 = vmatpush1.bf16.msra.mxu0 0
    %1112 = vmatprep.subr.bf16.mxu0 0
    %1113 = vmatpush1.bf16.msra.mxu0 0
    %1114 = vmatprep.subr.bf16.mxu0 0
    %1115 = vmatpush1.bf16.msra.mxu0 0
    %1116 = vmatprep.subr.bf16.mxu0 0
    %1117 = vmatpush1.bf16.msra.mxu0 0
    %1118 = vmatprep.subr.bf16.mxu0 0
    %1119 = vmatpush1.bf16.msra.mxu0 0
    %1120 = vmatprep.subr.bf16.mxu0 0
    %1121 = vmatpush1.bf16.msra.mxu0 0
    %1122 = vmatprep.mubr.bf16.mxu0 0
    %1123 = vmatmul.mubr.bf16.gmra.mrb[0].mxu0 %v1023
    %v1124 = vpop.f32.mrb[0].mxu0
    %v1125 = vadd.f32 0.0, %v1124
    %v1126 = vpop.f32.mrb[0].mxu0
    %v1127 = vpop.f32.mrb[0].mxu0
    %v1128 = vpop.f32.mrb[0].mxu0
    %1129 = vdwg.mxu0
    %v1130 = vadd.f32 %v468, %v1125
    %v1131 = vxor.u32 %v1130, 2147483648
    %v1132 = vmul.f32 %v1131, 1.442695
    %v1133 = vpow.pop %v1132
    %v1134 = vadd.f32 %v1133, 1.0
    %v1135 = vrcp.pop %v1134
    %v1136 = vmul.f32 1.0, %v1135
    %v1137 = vtanh.pop %v1130
    %v1138 = vmul.f32 %v1136, %v964
    %1140 = vrot.lane.b32.xlu0 %v1137, 64
    %v1141 = vpop.permute.xlu0 %1140
    %v1143 = vmul.f32 %v1136, %v1141
    %1145 = vrot.lane.b32.xlu0 %v1143, 32
    %v1146 = vpop.permute.xlu0 %1145
    %v1148 = vadd.f32 %v1138, %v1146
    %v1149 = vtanh.pop %v1148
    %1151 = vrot.lane.b32.xlu0 %v1149, 64
    %v1152 = vpop.permute.xlu0 %1151
    %v1154 = vmul.f32 %v1136, %v1152
    %v1155 = vpack.c.bf16 %v1154, %v1154
    %v1156 = vpack.c.bf16 %v1089, %v1089
    %1158 = vrot.lane.b32.xlu0 %v1156, 32
    %v1159 = vpop.permute.xlu0 %1158
    %v1161 = vsel %vm409, %v1159, 0
    %1163 = vmatprep.subr.bf16.mxu0 0
    %1164 = vmatpush1.bf16.msra.mxu0 %v589
    %1165 = vmatprep.subr.bf16.mxu0 0
    %1166 = vmatpush1.bf16.msra.mxu0 %v590
    %1167 = vmatprep.subr.bf16.mxu0 0
    %1168 = vmatpush1.bf16.msra.mxu0 0
    %1169 = vmatprep.subr.bf16.mxu0 0
    %1170 = vmatpush1.bf16.msra.mxu0 0
    %1171 = vmatprep.subr.bf16.mxu0 0
    %1172 = vmatpush1.bf16.msra.mxu0 0
    %1173 = vmatprep.subr.bf16.mxu0 0
    %1174 = vmatpush1.bf16.msra.mxu0 0
    %1175 = vmatprep.subr.bf16.mxu0 0
    %1176 = vmatpush1.bf16.msra.mxu0 0
    %1177 = vmatprep.subr.bf16.mxu0 0
    %1178 = vmatpush1.bf16.msra.mxu0 0
    %1179 = vmatprep.subr.bf16.mxu0 0
    %1180 = vmatpush1.bf16.msra.mxu0 0
    %1181 = vmatprep.subr.bf16.mxu0 0
    %1182 = vmatpush1.bf16.msra.mxu0 0
    %1183 = vmatprep.subr.bf16.mxu0 0
    %1184 = vmatpush1.bf16.msra.mxu0 0
    %1185 = vmatprep.subr.bf16.mxu0 0
    %1186 = vmatpush1.bf16.msra.mxu0 0
    %1187 = vmatprep.subr.bf16.mxu0 0
    %1188 = vmatpush1.bf16.msra.mxu0 0
    %1189 = vmatprep.subr.bf16.mxu0 0
    %1190 = vmatpush1.bf16.msra.mxu0 0
    %1191 = vmatprep.subr.bf16.mxu0 0
    %1192 = vmatpush1.bf16.msra.mxu0 0
    %1193 = vmatprep.subr.bf16.mxu0 0
    %1194 = vmatpush1.bf16.msra.mxu0 0
    %1195 = vmatprep.mubr.bf16.mxu0 0
    %1196 = vmatmul.mubr.bf16.gmra.mrb[0].mxu0 %v1161
    %v1197 = vpop.f32.mrb[0].mxu0
    %v1198 = vadd.f32 0.0, %v1197
    %v1199 = vpop.f32.mrb[0].mxu0
    %v1200 = vpop.f32.mrb[0].mxu0
    %v1201 = vpop.f32.mrb[0].mxu0
    %1202 = vdwg.mxu0
    %1204 = vrot.lane.b32.xlu0 %v1155, 32
    %v1205 = vpop.permute.xlu0 %1204
    %v1207 = vsel %vm409, %v1205, 0
    %1209 = vmatprep.subr.bf16.mxu0 0
    %1210 = vmatpush1.bf16.msra.mxu0 %v644
    %1211 = vmatprep.subr.bf16.mxu0 0
    %1212 = vmatpush1.bf16.msra.mxu0 %v645
    %1213 = vmatprep.subr.bf16.mxu0 0
    %1214 = vmatpush1.bf16.msra.mxu0 0
    %1215 = vmatprep.subr.bf16.mxu0 0
    %1216 = vmatpush1.bf16.msra.mxu0 0
    %1217 = vmatprep.subr.bf16.mxu0 0
    %1218 = vmatpush1.bf16.msra.mxu0 0
    %1219 = vmatprep.subr.bf16.mxu0 0
    %1220 = vmatpush1.bf16.msra.mxu0 0
    %1221 = vmatprep.subr.bf16.mxu0 0
    %1222 = vmatpush1.bf16.msra.mxu0 0
    %1223 = vmatprep.subr.bf16.mxu0 0
    %1224 = vmatpush1.bf16.msra.mxu0 0
    %1225 = vmatprep.subr.bf16.mxu0 0
    %1226 = vmatpush1.bf16.msra.mxu0 0
    %1227 = vmatprep.subr.bf16.mxu0 0
    %1228 = vmatpush1.bf16.msra.mxu0 0
    %1229 = vmatprep.subr.bf16.mxu0 0
    %1230 = vmatpush1.bf16.msra.mxu0 0
    %1231 = vmatprep.subr.bf16.mxu0 0
    %1232 = vmatpush1.bf16.msra.mxu0 0
    %1233 = vmatprep.subr.bf16.mxu0 0
    %1234 = vmatpush1.bf16.msra.mxu0 0
    %1235 = vmatprep.subr.bf16.mxu0 0
    %1236 = vmatpush1.bf16.msra.mxu0 0
    %1237 = vmatprep.subr.bf16.mxu0 0
    %1238 = vmatpush1.bf16.msra.mxu0 0
    %1239 = vmatprep.subr.bf16.mxu0 0
    %1240 = vmatpush1.bf16.msra.mxu0 0
    %1241 = vmatprep.mubr.bf16.mxu0 0
    %1242 = vmatmul.mubr.bf16.gmra.mrb[0].mxu0 %v1207
    %v1243 = vpop.f32.mrb[0].mxu0
    %v1244 = vadd.f32 %v1198, %v1243
    %v1245 = vpop.f32.mrb[0].mxu0
    %v1246 = vpop.f32.mrb[0].mxu0
    %v1247 = vpop.f32.mrb[0].mxu0
    %1248 = vdwg.mxu0
    %v1249 = vadd.f32 %v1244, %v695
    %v1250 = vxor.u32 %v1249, 2147483648
    %v1251 = vmul.f32 %v1250, 1.442695
    %v1252 = vpow.pop %v1251
    %v1253 = vadd.f32 %v1252, 1.0
    %v1254 = vrcp.pop %v1253
    %v1255 = vmul.f32 1.0, %v1254
    %v1256 = vtanh.pop %v1249
    %v1257 = vmul.f32 %v1255, %v1083
    %1259 = vrot.lane.b32.xlu0 %v1256, 64
    %v1260 = vpop.permute.xlu0 %1259
    %v1262 = vmul.f32 %v1255, %v1260
    %1264 = vrot.lane.b32.xlu0 %v1262, 32
    %v1265 = vpop.permute.xlu0 %1264
    %v1267 = vadd.f32 %v1257, %v1265
    %v1268 = vtanh.pop %v1267
    %1270 = vrot.lane.b32.xlu0 %v1268, 64
    %v1271 = vpop.permute.xlu0 %1270
    %v1273 = vmul.f32 %v1255, %v1271
    %1274 = vmatprep.subr.bf16.mxu0 0
    %1275 = vmatpush1.bf16.msra.mxu0 %v508
    %1276 = vmatprep.subr.bf16.mxu0 0
    %1277 = vmatpush1.bf16.msra.mxu0 %v509
    %1278 = vmatprep.subr.bf16.mxu0 0
    %1279 = vmatpush1.bf16.msra.mxu0 0
    %1280 = vmatprep.subr.bf16.mxu0 0
    %1281 = vmatpush1.bf16.msra.mxu0 0
    %1282 = vmatprep.subr.bf16.mxu0 0
    %1283 = vmatpush1.bf16.msra.mxu0 0
    %1284 = vmatprep.subr.bf16.mxu0 0
    %1285 = vmatpush1.bf16.msra.mxu0 0
    %1286 = vmatprep.subr.bf16.mxu0 0
    %1287 = vmatpush1.bf16.msra.mxu0 0
    %1288 = vmatprep.subr.bf16.mxu0 0
    %1289 = vmatpush1.bf16.msra.mxu0 0
    %1290 = vmatprep.subr.bf16.mxu0 0
    %1291 = vmatpush1.bf16.msra.mxu0 0
    %1292 = vmatprep.subr.bf16.mxu0 0
    %1293 = vmatpush1.bf16.msra.mxu0 0
    %1294 = vmatprep.subr.bf16.mxu0 0
    %1295 = vmatpush1.bf16.msra.mxu0 0
    %1296 = vmatprep.subr.bf16.mxu0 0
    %1297 = vmatpush1.bf16.msra.mxu0 0
    %1298 = vmatprep.subr.bf16.mxu0 0
    %1299 = vmatpush1.bf16.msra.mxu0 0
    %1300 = vmatprep.subr.bf16.mxu0 0
    %1301 = vmatpush1.bf16.msra.mxu0 0
    %1302 = vmatprep.subr.bf16.mxu0 0
    %1303 = vmatpush1.bf16.msra.mxu0 0
    %1304 = vmatprep.subr.bf16.mxu0 0
    %1305 = vmatpush1.bf16.msra.mxu0 0
    %1306 = vmatprep.mubr.bf16.mxu0 0
    %1307 = vmatmul.mubr.bf16.gmra.mrb[0].mxu0 %v1207
    %v1308 = vpop.f32.mrb[0].mxu0
    %v1309 = vadd.f32 0.0, %v1308
    %v1310 = vpop.f32.mrb[0].mxu0
    %v1311 = vpop.f32.mrb[0].mxu0
    %v1312 = vpop.f32.mrb[0].mxu0
    %1313 = vdwg.mxu0
    %v1314 = vadd.f32 %v473, %v1309
    %v1315 = vxor.u32 %v1314, 2147483648
    %v1316 = vmul.f32 %v1315, 1.442695
    %v1317 = vpow.pop %v1316
    %v1318 = vadd.f32 %v1317, 1.0
    %v1319 = vrcp.pop %v1318
    %v1320 = vmul.f32 1.0, %v1319
    %v1321 = vtanh.pop %v1314
    %v1322 = vmul.f32 %v1320, %v1148
    %1324 = vrot.lane.b32.xlu0 %v1321, 64
    %v1325 = vpop.permute.xlu0 %1324
    %v1327 = vmul.f32 %v1320, %v1325
    %1329 = vrot.lane.b32.xlu0 %v1327, 32
    %v1330 = vpop.permute.xlu0 %1329
    %v1332 = vadd.f32 %v1322, %v1330
    %v1333 = vtanh.pop %v1332
    %1335 = vrot.lane.b32.xlu0 %v1333, 64
    %v1336 = vpop.permute.xlu0 %1335
    %v1338 = vmul.f32 %v1320, %v1336
    %v1339 = vpack.c.bf16 %v1338, %v1338
    %v1340 = vpack.c.bf16 %v1273, %v1273
    %1342 = vrot.lane.b32.xlu0 %v1340, 32
    %v1343 = vpop.permute.xlu0 %1342
    %v1345 = vsel %vm409, %v1343, 0
    %1347 = vmatprep.subr.bf16.mxu0 0
    %1348 = vmatpush1.bf16.msra.mxu0 %v589
    %1349 = vmatprep.subr.bf16.mxu0 0
    %1350 = vmatpush1.bf16.msra.mxu0 %v590
    %1351 = vmatprep.subr.bf16.mxu0 0
    %1352 = vmatpush1.bf16.msra.mxu0 0
    %1353 = vmatprep.subr.bf16.mxu0 0
    %1354 = vmatpush1.bf16.msra.mxu0 0
    %1355 = vmatprep.subr.bf16.mxu0 0
    %1356 = vmatpush1.bf16.msra.mxu0 0
    %1357 = vmatprep.subr.bf16.mxu0 0
    %1358 = vmatpush1.bf16.msra.mxu0 0
    %1359 = vmatprep.subr.bf16.mxu0 0
    %1360 = vmatpush1.bf16.msra.mxu0 0
    %1361 = vmatprep.subr.bf16.mxu0 0
    %1362 = vmatpush1.bf16.msra.mxu0 0
    %1363 = vmatprep.subr.bf16.mxu0 0
    %1364 = vmatpush1.bf16.msra.mxu0 0
    %1365 = vmatprep.subr.bf16.mxu0 0
    %1366 = vmatpush1.bf16.msra.mxu0 0
    %1367 = vmatprep.subr.bf16.mxu0 0
    %1368 = vmatpush1.bf16.msra.mxu0 0
    %1369 = vmatprep.subr.bf16.mxu0 0
    %1370 = vmatpush1.bf16.msra.mxu0 0
    %1371 = vmatprep.subr.bf16.mxu0 0
    %1372 = vmatpush1.bf16.msra.mxu0 0
    %1373 = vmatprep.subr.bf16.mxu0 0
    %1374 = vmatpush1.bf16.msra.mxu0 0
    %1375 = vmatprep.subr.bf16.mxu0 0
    %1376 = vmatpush1.bf16.msra.mxu0 0
    %1377 = vmatprep.subr.bf16.mxu0 0
    %1378 = vmatpush1.bf16.msra.mxu0 0
    %1379 = vmatprep.mubr.bf16.mxu0 0
    %1380 = vmatmul.mubr.bf16.gmra.mrb[0].mxu0 %v1345
    %v1381 = vpop.f32.mrb[0].mxu0
    %v1382 = vadd.f32 0.0, %v1381
    %v1383 = vpop.f32.mrb[0].mxu0
    %v1384 = vpop.f32.mrb[0].mxu0
    %v1385 = vpop.f32.mrb[0].mxu0
    %1386 = vdwg.mxu0
    %1388 = vrot.lane.b32.xlu0 %v1339, 32
    %v1389 = vpop.permute.xlu0 %1388
    %v1391 = vsel %vm409, %v1389, 0
    %1393 = vmatprep.subr.bf16.mxu0 0
    %1394 = vmatpush1.bf16.msra.mxu0 %v644
    %1395 = vmatprep.subr.bf16.mxu0 0
    %1396 = vmatpush1.bf16.msra.mxu0 %v645
    %1397 = vmatprep.subr.bf16.mxu0 0
    %1398 = vmatpush1.bf16.msra.mxu0 0
    %1399 = vmatprep.subr.bf16.mxu0 0
    %1400 = vmatpush1.bf16.msra.mxu0 0
    %1401 = vmatprep.subr.bf16.mxu0 0
    %1402 = vmatpush1.bf16.msra.mxu0 0
    %1403 = vmatprep.subr.bf16.mxu0 0
    %1404 = vmatpush1.bf16.msra.mxu0 0
    %1405 = vmatprep.subr.bf16.mxu0 0
    %1406 = vmatpush1.bf16.msra.mxu0 0
    %1407 = vmatprep.subr.bf16.mxu0 0
    %1408 = vmatpush1.bf16.msra.mxu0 0
    %1409 = vmatprep.subr.bf16.mxu0 0
    %1410 = vmatpush1.bf16.msra.mxu0 0
    %1411 = vmatprep.subr.bf16.mxu0 0
    %1412 = vmatpush1.bf16.msra.mxu0 0
    %1413 = vmatprep.subr.bf16.mxu0 0
    %1414 = vmatpush1.bf16.msra.mxu0 0
    %1415 = vmatprep.subr.bf16.mxu0 0
    %1416 = vmatpush1.bf16.msra.mxu0 0
    %1417 = vmatprep.subr.bf16.mxu0 0
    %1418 = vmatpush1.bf16.msra.mxu0 0
    %1419 = vmatprep.subr.bf16.mxu0 0
    %1420 = vmatpush1.bf16.msra.mxu0 0
    %1421 = vmatprep.subr.bf16.mxu0 0
    %1422 = vmatpush1.bf16.msra.mxu0 0
    %1423 = vmatprep.subr.bf16.mxu0 0
    %1424 = vmatpush1.bf16.msra.mxu0 0
    %1425 = vmatprep.mubr.bf16.mxu0 0
    %1426 = vmatmul.mubr.bf16.gmra.mrb[0].mxu0 %v1391
    %v1427 = vpop.f32.mrb[0].mxu0
    %v1428 = vadd.f32 %v1382, %v1427
    %v1429 = vpop.f32.mrb[0].mxu0
    %v1430 = vpop.f32.mrb[0].mxu0
    %v1431 = vpop.f32.mrb[0].mxu0
    %1432 = vdwg.mxu0
    %v1433 = vadd.f32 %v1428, %v695
    %v1434 = vxor.u32 %v1433, 2147483648
    %v1435 = vmul.f32 %v1434, 1.442695
    %v1436 = vpow.pop %v1435
    %v1437 = vadd.f32 %v1436, 1.0
    %v1438 = vrcp.pop %v1437
    %v1439 = vmul.f32 1.0, %v1438
    %v1440 = vtanh.pop %v1433
    %v1441 = vmul.f32 %v1439, %v1267
    %1443 = vrot.lane.b32.xlu0 %v1440, 64
    %v1444 = vpop.permute.xlu0 %1443
    %v1446 = vmul.f32 %v1439, %v1444
    %1448 = vrot.lane.b32.xlu0 %v1446, 32
    %v1449 = vpop.permute.xlu0 %1448
    %v1451 = vadd.f32 %v1441, %v1449
    %v1452 = vtanh.pop %v1451
    %1454 = vrot.lane.b32.xlu0 %v1452, 64
    %v1455 = vpop.permute.xlu0 %1454
    %v1457 = vmul.f32 %v1439, %v1455
    %1458 = vmatprep.subr.bf16.mxu0 0
    %1459 = vmatpush1.bf16.msra.mxu0 %v508
    %1460 = vmatprep.subr.bf16.mxu0 0
    %1461 = vmatpush1.bf16.msra.mxu0 %v509
    %1462 = vmatprep.subr.bf16.mxu0 0
    %1463 = vmatpush1.bf16.msra.mxu0 0
    %1464 = vmatprep.subr.bf16.mxu0 0
    %1465 = vmatpush1.bf16.msra.mxu0 0
    %1466 = vmatprep.subr.bf16.mxu0 0
    %1467 = vmatpush1.bf16.msra.mxu0 0
    %1468 = vmatprep.subr.bf16.mxu0 0
    %1469 = vmatpush1.bf16.msra.mxu0 0
    %1470 = vmatprep.subr.bf16.mxu0 0
    %1471 = vmatpush1.bf16.msra.mxu0 0
    %1472 = vmatprep.subr.bf16.mxu0 0
    %1473 = vmatpush1.bf16.msra.mxu0 0
    %1474 = vmatprep.subr.bf16.mxu0 0
    %1475 = vmatpush1.bf16.msra.mxu0 0
    %1476 = vmatprep.subr.bf16.mxu0 0
    %1477 = vmatpush1.bf16.msra.mxu0 0
    %1478 = vmatprep.subr.bf16.mxu0 0
    %1479 = vmatpush1.bf16.msra.mxu0 0
    %1480 = vmatprep.subr.bf16.mxu0 0
    %1481 = vmatpush1.bf16.msra.mxu0 0
    %1482 = vmatprep.subr.bf16.mxu0 0
    %1483 = vmatpush1.bf16.msra.mxu0 0
    %1484 = vmatprep.subr.bf16.mxu0 0
    %1485 = vmatpush1.bf16.msra.mxu0 0
    %1486 = vmatprep.subr.bf16.mxu0 0
    %1487 = vmatpush1.bf16.msra.mxu0 0
    %1488 = vmatprep.subr.bf16.mxu0 0
    %1489 = vmatpush1.bf16.msra.mxu0 0
    %1490 = vmatprep.mubr.bf16.mxu0 0
    %1491 = vmatmul.mubr.bf16.gmra.mrb[0].mxu0 %v1391
    %v1492 = vpop.f32.mrb[0].mxu0
    %v1493 = vadd.f32 0.0, %v1492
    %v1494 = vpop.f32.mrb[0].mxu0
    %v1495 = vpop.f32.mrb[0].mxu0
    %v1496 = vpop.f32.mrb[0].mxu0
    %1497 = vdwg.mxu0
    %v1498 = vadd.f32 %v476, %v1493
    %v1499 = vxor.u32 %v1498, 2147483648
    %v1500 = vmul.f32 %v1499, 1.442695
    %v1501 = vpow.pop %v1500
    %v1502 = vadd.f32 %v1501, 1.0
    %v1503 = vrcp.pop %v1502
    %v1504 = vmul.f32 1.0, %v1503
    %v1505 = vtanh.pop %v1498
    %v1506 = vmul.f32 %v1504, %v1332
    %1508 = vrot.lane.b32.xlu0 %v1505, 64
    %v1509 = vpop.permute.xlu0 %1508
    %v1511 = vmul.f32 %v1504, %v1509
    %1513 = vrot.lane.b32.xlu0 %v1511, 32
    %v1514 = vpop.permute.xlu0 %1513
    %v1516 = vadd.f32 %v1506, %v1514
    %v1517 = vtanh.pop %v1516
    %1519 = vrot.lane.b32.xlu0 %v1517, 64
    %v1520 = vpop.permute.xlu0 %1519
    %v1522 = vmul.f32 %v1504, %v1520
    %v1523 = vpack.c.bf16 %v1522, %v1522
    %v1524 = vpack.c.bf16 %v1457, %v1457
    %1526 = vrot.lane.b32.xlu0 %v1524, 32
    %v1527 = vpop.permute.xlu0 %1526
    %v1529 = vsel %vm409, %v1527, 0
    %1531 = vmatprep.subr.bf16.mxu0 0
    %1532 = vmatpush1.bf16.msra.mxu0 %v589
    %1533 = vmatprep.subr.bf16.mxu0 0
    %1534 = vmatpush1.bf16.msra.mxu0 %v590
    %1535 = vmatprep.subr.bf16.mxu0 0
    %1536 = vmatpush1.bf16.msra.mxu0 0
    %1537 = vmatprep.subr.bf16.mxu0 0
    %1538 = vmatpush1.bf16.msra.mxu0 0
    %1539 = vmatprep.subr.bf16.mxu0 0
    %1540 = vmatpush1.bf16.msra.mxu0 0
    %1541 = vmatprep.subr.bf16.mxu0 0
    %1542 = vmatpush1.bf16.msra.mxu0 0
    %1543 = vmatprep.subr.bf16.mxu0 0
    %1544 = vmatpush1.bf16.msra.mxu0 0
    %1545 = vmatprep.subr.bf16.mxu0 0
    %1546 = vmatpush1.bf16.msra.mxu0 0
    %1547 = vmatprep.subr.bf16.mxu0 0
    %1548 = vmatpush1.bf16.msra.mxu0 0
    %1549 = vmatprep.subr.bf16.mxu0 0
    %1550 = vmatpush1.bf16.msra.mxu0 0
    %1551 = vmatprep.subr.bf16.mxu0 0
    %1552 = vmatpush1.bf16.msra.mxu0 0
    %1553 = vmatprep.subr.bf16.mxu0 0
    %1554 = vmatpush1.bf16.msra.mxu0 0
    %1555 = vmatprep.subr.bf16.mxu0 0
    %1556 = vmatpush1.bf16.msra.mxu0 0
    %1557 = vmatprep.subr.bf16.mxu0 0
    %1558 = vmatpush1.bf16.msra.mxu0 0
    %1559 = vmatprep.subr.bf16.mxu0 0
    %1560 = vmatpush1.bf16.msra.mxu0 0
    %1561 = vmatprep.subr.bf16.mxu0 0
    %1562 = vmatpush1.bf16.msra.mxu0 0
    %1563 = vmatprep.mubr.bf16.mxu0 0
    %1564 = vmatmul.mubr.bf16.gmra.mrb[0].mxu0 %v1529
    %v1565 = vpop.f32.mrb[0].mxu0
    %v1566 = vadd.f32 0.0, %v1565
    %v1567 = vpop.f32.mrb[0].mxu0
    %v1568 = vpop.f32.mrb[0].mxu0
    %v1569 = vpop.f32.mrb[0].mxu0
    %1570 = vdwg.mxu0
    %1572 = vrot.lane.b32.xlu0 %v1523, 32
    %v1573 = vpop.permute.xlu0 %1572
    %v1575 = vsel %vm409, %v1573, 0
    %1577 = vmatprep.subr.bf16.mxu0 0
    %1578 = vmatpush1.bf16.msra.mxu0 %v644
    %1579 = vmatprep.subr.bf16.mxu0 0
    %1580 = vmatpush1.bf16.msra.mxu0 %v645
    %1581 = vmatprep.subr.bf16.mxu0 0
    %1582 = vmatpush1.bf16.msra.mxu0 0
    %1583 = vmatprep.subr.bf16.mxu0 0
    %1584 = vmatpush1.bf16.msra.mxu0 0
    %1585 = vmatprep.subr.bf16.mxu0 0
    %1586 = vmatpush1.bf16.msra.mxu0 0
    %1587 = vmatprep.subr.bf16.mxu0 0
    %1588 = vmatpush1.bf16.msra.mxu0 0
    %1589 = vmatprep.subr.bf16.mxu0 0
    %1590 = vmatpush1.bf16.msra.mxu0 0
    %1591 = vmatprep.subr.bf16.mxu0 0
    %1592 = vmatpush1.bf16.msra.mxu0 0
    %1593 = vmatprep.subr.bf16.mxu0 0
    %1594 = vmatpush1.bf16.msra.mxu0 0
    %1595 = vmatprep.subr.bf16.mxu0 0
    %1596 = vmatpush1.bf16.msra.mxu0 0
    %1597 = vmatprep.subr.bf16.mxu0 0
    %1598 = vmatpush1.bf16.msra.mxu0 0
    %1599 = vmatprep.subr.bf16.mxu0 0
    %1600 = vmatpush1.bf16.msra.mxu0 0
    %1601 = vmatprep.subr.bf16.mxu0 0
    %1602 = vmatpush1.bf16.msra.mxu0 0
    %1603 = vmatprep.subr.bf16.mxu0 0
    %1604 = vmatpush1.bf16.msra.mxu0 0
    %1605 = vmatprep.subr.bf16.mxu0 0
    %1606 = vmatpush1.bf16.msra.mxu0 0
    %1607 = vmatprep.subr.bf16.mxu0 0
    %1608 = vmatpush1.bf16.msra.mxu0 0
    %1609 = vmatprep.mubr.bf16.mxu0 0
    %1610 = vmatmul.mubr.bf16.gmra.mrb[0].mxu0 %v1575
    %v1611 = vpop.f32.mrb[0].mxu0
    %v1612 = vadd.f32 %v1566, %v1611
    %v1613 = vpop.f32.mrb[0].mxu0
    %v1614 = vpop.f32.mrb[0].mxu0
    %v1615 = vpop.f32.mrb[0].mxu0
    %1616 = vdwg.mxu0
    %v1617 = vadd.f32 %v1612, %v695
    %v1618 = vxor.u32 %v1617, 2147483648
    %v1619 = vmul.f32 %v1618, 1.442695
    %v1620 = vpow.pop %v1619
    %v1621 = vadd.f32 %v1620, 1.0
    %v1622 = vrcp.pop %v1621
    %v1623 = vmul.f32 1.0, %v1622
    %v1624 = vtanh.pop %v1617
    %v1625 = vmul.f32 %v1623, %v1451
    %1627 = vrot.lane.b32.xlu0 %v1624, 64
    %v1628 = vpop.permute.xlu0 %1627
    %v1630 = vmul.f32 %v1623, %v1628
    %1632 = vrot.lane.b32.xlu0 %v1630, 32
    %v1633 = vpop.permute.xlu0 %1632
    %v1635 = vadd.f32 %v1625, %v1633
    %v1636 = vtanh.pop %v1635
    %1638 = vrot.lane.b32.xlu0 %v1636, 64
    %v1639 = vpop.permute.xlu0 %1638
    %v1641 = vmul.f32 %v1623, %v1639
    %1642 = vmatprep.subr.bf16.mxu0 0
    %1643 = vmatpush1.bf16.msra.mxu0 %v508
    %1644 = vmatprep.subr.bf16.mxu0 0
    %1645 = vmatpush1.bf16.msra.mxu0 %v509
    %1646 = vmatprep.subr.bf16.mxu0 0
    %1647 = vmatpush1.bf16.msra.mxu0 0
    %1648 = vmatprep.subr.bf16.mxu0 0
    %1649 = vmatpush1.bf16.msra.mxu0 0
    %1650 = vmatprep.subr.bf16.mxu0 0
    %1651 = vmatpush1.bf16.msra.mxu0 0
    %1652 = vmatprep.subr.bf16.mxu0 0
    %1653 = vmatpush1.bf16.msra.mxu0 0
    %1654 = vmatprep.subr.bf16.mxu0 0
    %1655 = vmatpush1.bf16.msra.mxu0 0
    %1656 = vmatprep.subr.bf16.mxu0 0
    %1657 = vmatpush1.bf16.msra.mxu0 0
    %1658 = vmatprep.subr.bf16.mxu0 0
    %1659 = vmatpush1.bf16.msra.mxu0 0
    %1660 = vmatprep.subr.bf16.mxu0 0
    %1661 = vmatpush1.bf16.msra.mxu0 0
    %1662 = vmatprep.subr.bf16.mxu0 0
    %1663 = vmatpush1.bf16.msra.mxu0 0
    %1664 = vmatprep.subr.bf16.mxu0 0
    %1665 = vmatpush1.bf16.msra.mxu0 0
    %1666 = vmatprep.subr.bf16.mxu0 0
    %1667 = vmatpush1.bf16.msra.mxu0 0
    %1668 = vmatprep.subr.bf16.mxu0 0
    %1669 = vmatpush1.bf16.msra.mxu0 0
    %1670 = vmatprep.subr.bf16.mxu0 0
    %1671 = vmatpush1.bf16.msra.mxu0 0
    %1672 = vmatprep.subr.bf16.mxu0 0
    %1673 = vmatpush1.bf16.msra.mxu0 0
    %1674 = vmatprep.mubr.bf16.mxu0 0
    %1675 = vmatmul.mubr.bf16.gmra.mrb[0].mxu0 %v1575
    %v1676 = vpop.f32.mrb[0].mxu0
    %v1677 = vadd.f32 0.0, %v1676
    %v1678 = vpop.f32.mrb[0].mxu0
    %v1679 = vpop.f32.mrb[0].mxu0
    %v1680 = vpop.f32.mrb[0].mxu0
    %1681 = vdwg.mxu0
    %v1682 = vadd.f32 %v481, %v1677
    %v1683 = vxor.u32 %v1682, 2147483648
    %v1684 = vmul.f32 %v1683, 1.442695
    %v1685 = vpow.pop %v1684
    %v1686 = vadd.f32 %v1685, 1.0
    %v1687 = vrcp.pop %v1686
    %v1688 = vmul.f32 1.0, %v1687
    %v1689 = vtanh.pop %v1682
    %v1690 = vmul.f32 %v1688, %v1516
    %1692 = vrot.lane.b32.xlu0 %v1689, 64
    %v1693 = vpop.permute.xlu0 %1692
    %v1695 = vmul.f32 %v1688, %v1693
    %1697 = vrot.lane.b32.xlu0 %v1695, 32
    %v1698 = vpop.permute.xlu0 %1697
    %v1700 = vadd.f32 %v1690, %v1698
    %v1701 = vtanh.pop %v1700
    %1703 = vrot.lane.b32.xlu0 %v1701, 64
    %v1704 = vpop.permute.xlu0 %1703
    %v1706 = vmul.f32 %v1688, %v1704
    %v1707 = vpack.c.bf16 %v1706, %v1706
    %v1708 = vpack.c.bf16 %v1641, %v1641
    %1710 = vrot.lane.b32.xlu0 %v1708, 32
    %v1711 = vpop.permute.xlu0 %1710
    %v1713 = vsel %vm409, %v1711, 0
    %1715 = vmatprep.subr.bf16.mxu0 0
    %1716 = vmatpush1.bf16.msra.mxu0 %v589
    %1717 = vmatprep.subr.bf16.mxu0 0
    %1718 = vmatpush1.bf16.msra.mxu0 %v590
    %1719 = vmatprep.subr.bf16.mxu0 0
    %1720 = vmatpush1.bf16.msra.mxu0 0
    %1721 = vmatprep.subr.bf16.mxu0 0
    %1722 = vmatpush1.bf16.msra.mxu0 0
    %1723 = vmatprep.subr.bf16.mxu0 0
    %1724 = vmatpush1.bf16.msra.mxu0 0
    %1725 = vmatprep.subr.bf16.mxu0 0
    %1726 = vmatpush1.bf16.msra.mxu0 0
    %1727 = vmatprep.subr.bf16.mxu0 0
    %1728 = vmatpush1.bf16.msra.mxu0 0
    %1729 = vmatprep.subr.bf16.mxu0 0
    %1730 = vmatpush1.bf16.msra.mxu0 0
    %1731 = vmatprep.subr.bf16.mxu0 0
    %1732 = vmatpush1.bf16.msra.mxu0 0
    %1733 = vmatprep.subr.bf16.mxu0 0
    %1734 = vmatpush1.bf16.msra.mxu0 0
    %1735 = vmatprep.subr.bf16.mxu0 0
    %1736 = vmatpush1.bf16.msra.mxu0 0
    %1737 = vmatprep.subr.bf16.mxu0 0
    %1738 = vmatpush1.bf16.msra.mxu0 0
    %1739 = vmatprep.subr.bf16.mxu0 0
    %1740 = vmatpush1.bf16.msra.mxu0 0
    %1741 = vmatprep.subr.bf16.mxu0 0
    %1742 = vmatpush1.bf16.msra.mxu0 0
    %1743 = vmatprep.subr.bf16.mxu0 0
    %1744 = vmatpush1.bf16.msra.mxu0 0
    %1745 = vmatprep.subr.bf16.mxu0 0
    %1746 = vmatpush1.bf16.msra.mxu0 0
    %1747 = vmatprep.mubr.bf16.mxu0 0
    %1748 = vmatmul.mubr.bf16.gmra.mrb[0].mxu0 %v1713
    %v1749 = vpop.f32.mrb[0].mxu0
    %v1750 = vadd.f32 0.0, %v1749
    %v1751 = vpop.f32.mrb[0].mxu0
    %v1752 = vpop.f32.mrb[0].mxu0
    %v1753 = vpop.f32.mrb[0].mxu0
    %1754 = vdwg.mxu0
    %1756 = vrot.lane.b32.xlu0 %v1707, 32
    %v1757 = vpop.permute.xlu0 %1756
    %v1759 = vsel %vm409, %v1757, 0
    %1761 = vmatprep.subr.bf16.mxu0 0
    %1762 = vmatpush1.bf16.msra.mxu0 %v644
    %1763 = vmatprep.subr.bf16.mxu0 0
    %1764 = vmatpush1.bf16.msra.mxu0 %v645
    %1765 = vmatprep.subr.bf16.mxu0 0
    %1766 = vmatpush1.bf16.msra.mxu0 0
    %1767 = vmatprep.subr.bf16.mxu0 0
    %1768 = vmatpush1.bf16.msra.mxu0 0
    %1769 = vmatprep.subr.bf16.mxu0 0
    %1770 = vmatpush1.bf16.msra.mxu0 0
    %1771 = vmatprep.subr.bf16.mxu0 0
    %1772 = vmatpush1.bf16.msra.mxu0 0
    %1773 = vmatprep.subr.bf16.mxu0 0
    %1774 = vmatpush1.bf16.msra.mxu0 0
    %1775 = vmatprep.subr.bf16.mxu0 0
    %1776 = vmatpush1.bf16.msra.mxu0 0
    %1777 = vmatprep.subr.bf16.mxu0 0
    %1778 = vmatpush1.bf16.msra.mxu0 0
    %1779 = vmatprep.subr.bf16.mxu0 0
    %1780 = vmatpush1.bf16.msra.mxu0 0
    %1781 = vmatprep.subr.bf16.mxu0 0
    %1782 = vmatpush1.bf16.msra.mxu0 0
    %1783 = vmatprep.subr.bf16.mxu0 0
    %1784 = vmatpush1.bf16.msra.mxu0 0
    %1785 = vmatprep.subr.bf16.mxu0 0
    %1786 = vmatpush1.bf16.msra.mxu0 0
    %1787 = vmatprep.subr.bf16.mxu0 0
    %1788 = vmatpush1.bf16.msra.mxu0 0
    %1789 = vmatprep.subr.bf16.mxu0 0
    %1790 = vmatpush1.bf16.msra.mxu0 0
    %1791 = vmatprep.subr.bf16.mxu0 0
    %1792 = vmatpush1.bf16.msra.mxu0 0
    %1793 = vmatprep.mubr.bf16.mxu0 0
    %1794 = vmatmul.mubr.bf16.gmra.mrb[0].mxu0 %v1759
    %v1795 = vpop.f32.mrb[0].mxu0
    %v1796 = vadd.f32 %v1750, %v1795
    %v1797 = vpop.f32.mrb[0].mxu0
    %v1798 = vpop.f32.mrb[0].mxu0
    %v1799 = vpop.f32.mrb[0].mxu0
    %1800 = vdwg.mxu0
    %v1801 = vadd.f32 %v1796, %v695
    %v1802 = vxor.u32 %v1801, 2147483648
    %v1803 = vmul.f32 %v1802, 1.442695
    %v1804 = vpow.pop %v1803
    %v1805 = vadd.f32 %v1804, 1.0
    %v1806 = vrcp.pop %v1805
    %v1807 = vmul.f32 1.0, %v1806
    %v1808 = vtanh.pop %v1801
    %v1809 = vmul.f32 %v1807, %v1635
    %1811 = vrot.lane.b32.xlu0 %v1808, 64
    %v1812 = vpop.permute.xlu0 %1811
    %v1814 = vmul.f32 %v1807, %v1812
    %1816 = vrot.lane.b32.xlu0 %v1814, 32
    %v1817 = vpop.permute.xlu0 %1816
    %v1819 = vadd.f32 %v1809, %v1817
    %v1820 = vtanh.pop %v1819
    %1822 = vrot.lane.b32.xlu0 %v1820, 64
    %v1823 = vpop.permute.xlu0 %1822
    %v1825 = vmul.f32 %v1807, %v1823
    %1826 = vmatprep.subr.bf16.mxu0 0
    %1827 = vmatpush1.bf16.msra.mxu0 %v508
    %1828 = vmatprep.subr.bf16.mxu0 0
    %1829 = vmatpush1.bf16.msra.mxu0 %v509
    %1830 = vmatprep.subr.bf16.mxu0 0
    %1831 = vmatpush1.bf16.msra.mxu0 0
    %1832 = vmatprep.subr.bf16.mxu0 0
    %1833 = vmatpush1.bf16.msra.mxu0 0
    %1834 = vmatprep.subr.bf16.mxu0 0
    %1835 = vmatpush1.bf16.msra.mxu0 0
    %1836 = vmatprep.subr.bf16.mxu0 0
    %1837 = vmatpush1.bf16.msra.mxu0 0
    %1838 = vmatprep.subr.bf16.mxu0 0
    %1839 = vmatpush1.bf16.msra.mxu0 0
    %1840 = vmatprep.subr.bf16.mxu0 0
    %1841 = vmatpush1.bf16.msra.mxu0 0
    %1842 = vmatprep.subr.bf16.mxu0 0
    %1843 = vmatpush1.bf16.msra.mxu0 0
    %1844 = vmatprep.subr.bf16.mxu0 0
    %1845 = vmatpush1.bf16.msra.mxu0 0
    %1846 = vmatprep.subr.bf16.mxu0 0
    %1847 = vmatpush1.bf16.msra.mxu0 0
    %1848 = vmatprep.subr.bf16.mxu0 0
    %1849 = vmatpush1.bf16.msra.mxu0 0
    %1850 = vmatprep.subr.bf16.mxu0 0
    %1851 = vmatpush1.bf16.msra.mxu0 0
    %1852 = vmatprep.subr.bf16.mxu0 0
    %1853 = vmatpush1.bf16.msra.mxu0 0
    %1854 = vmatprep.subr.bf16.mxu0 0
    %1855 = vmatpush1.bf16.msra.mxu0 0
    %1856 = vmatprep.subr.bf16.mxu0 0
    %1857 = vmatpush1.bf16.msra.mxu0 0
    %1858 = vmatprep.mubr.bf16.mxu0 0
    %1859 = vmatmul.mubr.bf16.gmra.mrb[0].mxu0 %v1759
    %v1860 = vpop.f32.mrb[0].mxu0
    %v1861 = vadd.f32 0.0, %v1860
    %v1862 = vpop.f32.mrb[0].mxu0
    %v1863 = vpop.f32.mrb[0].mxu0
    %v1864 = vpop.f32.mrb[0].mxu0
    %1865 = vdwg.mxu0
    %v1866 = vadd.f32 %v484, %v1861
    %v1867 = vxor.u32 %v1866, 2147483648
    %v1868 = vmul.f32 %v1867, 1.442695
    %v1869 = vpow.pop %v1868
    %v1870 = vadd.f32 %v1869, 1.0
    %v1871 = vrcp.pop %v1870
    %v1872 = vmul.f32 1.0, %v1871
    %v1873 = vtanh.pop %v1866
    %v1874 = vmul.f32 %v1872, %v1700
    %1876 = vrot.lane.b32.xlu0 %v1873, 64
    %v1877 = vpop.permute.xlu0 %1876
    %v1879 = vmul.f32 %v1872, %v1877
    %1881 = vrot.lane.b32.xlu0 %v1879, 32
    %v1882 = vpop.permute.xlu0 %1881
    %v1884 = vadd.f32 %v1874, %v1882
    %v1885 = vtanh.pop %v1884
    %1887 = vrot.lane.b32.xlu0 %v1885, 64
    %v1888 = vpop.permute.xlu0 %1887
    %v1890 = vmul.f32 %v1872, %v1888
    %v1891 = vpack.c.bf16 %v1890, %v1890
    %v1892 = vpack.c.bf16 %v1825, %v1825
    %1894 = vrot.lane.b32.xlu0 %v1892, 32
    %v1895 = vpop.permute.xlu0 %1894
    %v1897 = vsel %vm409, %v1895, 0
    %1899 = vmatprep.subr.bf16.mxu0 0
    %1900 = vmatpush1.bf16.msra.mxu0 %v589
    %1901 = vmatprep.subr.bf16.mxu0 0
    %1902 = vmatpush1.bf16.msra.mxu0 %v590
    %1903 = vmatprep.subr.bf16.mxu0 0
    %1904 = vmatpush1.bf16.msra.mxu0 0
    %1905 = vmatprep.subr.bf16.mxu0 0
    %1906 = vmatpush1.bf16.msra.mxu0 0
    %1907 = vmatprep.subr.bf16.mxu0 0
    %1908 = vmatpush1.bf16.msra.mxu0 0
    %1909 = vmatprep.subr.bf16.mxu0 0
    %1910 = vmatpush1.bf16.msra.mxu0 0
    %1911 = vmatprep.subr.bf16.mxu0 0
    %1912 = vmatpush1.bf16.msra.mxu0 0
    %1913 = vmatprep.subr.bf16.mxu0 0
    %1914 = vmatpush1.bf16.msra.mxu0 0
    %1915 = vmatprep.subr.bf16.mxu0 0
    %1916 = vmatpush1.bf16.msra.mxu0 0
    %1917 = vmatprep.subr.bf16.mxu0 0
    %1918 = vmatpush1.bf16.msra.mxu0 0
    %1919 = vmatprep.subr.bf16.mxu0 0
    %1920 = vmatpush1.bf16.msra.mxu0 0
    %1921 = vmatprep.subr.bf16.mxu0 0
    %1922 = vmatpush1.bf16.msra.mxu0 0
    %1923 = vmatprep.subr.bf16.mxu0 0
    %1924 = vmatpush1.bf16.msra.mxu0 0
    %1925 = vmatprep.subr.bf16.mxu0 0
    %1926 = vmatpush1.bf16.msra.mxu0 0
    %1927 = vmatprep.subr.bf16.mxu0 0
    %1928 = vmatpush1.bf16.msra.mxu0 0
    %1929 = vmatprep.subr.bf16.mxu0 0
    %1930 = vmatpush1.bf16.msra.mxu0 0
    %1931 = vmatprep.mubr.bf16.mxu0 0
    %1932 = vmatmul.mubr.bf16.gmra.mrb[0].mxu0 %v1897
    %v1933 = vpop.f32.mrb[0].mxu0
    %v1934 = vadd.f32 0.0, %v1933
    %v1935 = vpop.f32.mrb[0].mxu0
    %v1936 = vpop.f32.mrb[0].mxu0
    %v1937 = vpop.f32.mrb[0].mxu0
    %1938 = vdwg.mxu0
    %1940 = vrot.lane.b32.xlu0 %v1891, 32
    %v1941 = vpop.permute.xlu0 %1940
    %v1943 = vsel %vm409, %v1941, 0
    %1945 = vmatprep.subr.bf16.mxu0 0
    %1946 = vmatpush1.bf16.msra.mxu0 %v644
    %1947 = vmatprep.subr.bf16.mxu0 0
    %1948 = vmatpush1.bf16.msra.mxu0 %v645
    %1949 = vmatprep.subr.bf16.mxu0 0
    %1950 = vmatpush1.bf16.msra.mxu0 0
    %1951 = vmatprep.subr.bf16.mxu0 0
    %1952 = vmatpush1.bf16.msra.mxu0 0
    %1953 = vmatprep.subr.bf16.mxu0 0
    %1954 = vmatpush1.bf16.msra.mxu0 0
    %1955 = vmatprep.subr.bf16.mxu0 0
    %1956 = vmatpush1.bf16.msra.mxu0 0
    %1957 = vmatprep.subr.bf16.mxu0 0
    %1958 = vmatpush1.bf16.msra.mxu0 0
    %1959 = vmatprep.subr.bf16.mxu0 0
    %1960 = vmatpush1.bf16.msra.mxu0 0
    %1961 = vmatprep.subr.bf16.mxu0 0
    %1962 = vmatpush1.bf16.msra.mxu0 0
    %1963 = vmatprep.subr.bf16.mxu0 0
    %1964 = vmatpush1.bf16.msra.mxu0 0
    %1965 = vmatprep.subr.bf16.mxu0 0
    %1966 = vmatpush1.bf16.msra.mxu0 0
    %1967 = vmatprep.subr.bf16.mxu0 0
    %1968 = vmatpush1.bf16.msra.mxu0 0
    %1969 = vmatprep.subr.bf16.mxu0 0
    %1970 = vmatpush1.bf16.msra.mxu0 0
    %1971 = vmatprep.subr.bf16.mxu0 0
    %1972 = vmatpush1.bf16.msra.mxu0 0
    %1973 = vmatprep.subr.bf16.mxu0 0
    %1974 = vmatpush1.bf16.msra.mxu0 0
    %1975 = vmatprep.subr.bf16.mxu0 0
    %1976 = vmatpush1.bf16.msra.mxu0 0
    %1977 = vmatprep.mubr.bf16.mxu0 0
    %1978 = vmatmul.mubr.bf16.gmra.mrb[0].mxu0 %v1943
    %v1979 = vpop.f32.mrb[0].mxu0
    %v1980 = vadd.f32 %v1934, %v1979
    %v1981 = vpop.f32.mrb[0].mxu0
    %v1982 = vpop.f32.mrb[0].mxu0
    %v1983 = vpop.f32.mrb[0].mxu0
    %1984 = vdwg.mxu0
    %v1985 = vadd.f32 %v1980, %v695
    %v1986 = vxor.u32 %v1985, 2147483648
    %v1987 = vmul.f32 %v1986, 1.442695
    %v1988 = vpow.pop %v1987
    %v1989 = vadd.f32 %v1988, 1.0
    %v1990 = vrcp.pop %v1989
    %v1991 = vmul.f32 1.0, %v1990
    %v1992 = vtanh.pop %v1985
    %v1993 = vmul.f32 %v1991, %v1819
    %1995 = vrot.lane.b32.xlu0 %v1992, 64
    %v1996 = vpop.permute.xlu0 %1995
    %v1998 = vmul.f32 %v1991, %v1996
    %2000 = vrot.lane.b32.xlu0 %v1998, 32
    %v2001 = vpop.permute.xlu0 %2000
    %v2003 = vadd.f32 %v1993, %v2001
    %v2004 = vtanh.pop %v2003
    %2006 = vrot.lane.b32.xlu0 %v2004, 64
    %v2007 = vpop.permute.xlu0 %2006
    %v2009 = vmul.f32 %v1991, %v2007
    %v2010 = vld [vmem:[%s12] sm:$0xf]
    %v2011 = vld [vmem:[%s12 + $0x4] sm:$0xf]
    %v2012 = vld [vmem:[%s12 + $0x8] sm:$0xf]
    %v2013 = vld [vmem:[%s12 + $0xc] sm:$0xf]
    %v2014 = vld [vmem:[%s12 + $0x10] sm:$0xf]
    %v2015 = vld [vmem:[%s12 + $0x14] sm:$0xf]
    %v2016 = vld [vmem:[%s12 + $0x18] sm:$0xf]
    %v2017 = vld [vmem:[%s12 + $0x1c] sm:$0xf]
    %v2018 = vpack.c.bf16 %v2009, %v2009
    %2020 = vrot.lane.b32.xlu0 %v2018, 32
    %v2021 = vpop.permute.xlu0 %2020
    %v2026 = vunpack.c.l.b16 %v2014
    %v2027 = vunpack.c.l.b16 %v2015
    %v2028 = vunpack.c.l.b16 %v2016
    %v2029 = vunpack.c.l.b16 %v2017
    %v2030 = vpack.c.b16 %v2027, %v2026
    %v2031 = vpack.c.b16 %v2029, %v2028
    %v2035 = vsel %vm409, %v2021, 0
    %2037 = vmatprep.subr.bf16.mxu0 0
    %2038 = vmatpush1.bf16.msra.mxu0 %v2030
    %2039 = vmatprep.subr.bf16.mxu0 0
    %2040 = vmatpush1.bf16.msra.mxu0 %v2031
    %2041 = vmatprep.subr.bf16.mxu0 0
    %2042 = vmatpush1.bf16.msra.mxu0 0
    %2043 = vmatprep.subr.bf16.mxu0 0
    %2044 = vmatpush1.bf16.msra.mxu0 0
    %2045 = vmatprep.subr.bf16.mxu0 0
    %2046 = vmatpush1.bf16.msra.mxu0 0
    %2047 = vmatprep.subr.bf16.mxu0 0
    %2048 = vmatpush1.bf16.msra.mxu0 0
    %2049 = vmatprep.subr.bf16.mxu0 0
    %2050 = vmatpush1.bf16.msra.mxu0 0
    %2051 = vmatprep.subr.bf16.mxu0 0
    %2052 = vmatpush1.bf16.msra.mxu0 0
    %2053 = vmatprep.subr.bf16.mxu0 0
    %2054 = vmatpush1.bf16.msra.mxu0 0
    %2055 = vmatprep.subr.bf16.mxu0 0
    %2056 = vmatpush1.bf16.msra.mxu0 0
    %2057 = vmatprep.subr.bf16.mxu0 0
    %2058 = vmatpush1.bf16.msra.mxu0 0
    %2059 = vmatprep.subr.bf16.mxu0 0
    %2060 = vmatpush1.bf16.msra.mxu0 0
    %2061 = vmatprep.subr.bf16.mxu0 0
    %2062 = vmatpush1.bf16.msra.mxu0 0
    %2063 = vmatprep.subr.bf16.mxu0 0
    %2064 = vmatpush1.bf16.msra.mxu0 0
    %2065 = vmatprep.subr.bf16.mxu0 0
    %2066 = vmatpush1.bf16.msra.mxu0 0
    %2067 = vmatprep.subr.bf16.mxu0 0
    %2068 = vmatpush1.bf16.msra.mxu0 0
    %2069 = vmatprep.mubr.bf16.mxu0 0
    %2070 = vmatmul.mubr.bf16.gmra.mrb[0].mxu0 %v2035
    %v2071 = vpop.f32.mrb[0].mxu0
    %v2072 = vadd.f32 0.0, %v2071
    %v2073 = vpop.f32.mrb[0].mxu0
    %v2074 = vpop.f32.mrb[0].mxu0
    %v2075 = vpop.f32.mrb[0].mxu0
    %2076 = vdwg.mxu0
    %v2081 = vunpack.c.l.b16 %v2010
    %v2082 = vunpack.c.l.b16 %v2011
    %v2083 = vunpack.c.l.b16 %v2012
    %v2084 = vunpack.c.l.b16 %v2013
    %v2085 = vpack.c.b16 %v2082, %v2081
    %v2086 = vpack.c.b16 %v2084, %v2083
    %2089 = vmatprep.subr.bf16.mxu0 0
    %2090 = vmatpush1.bf16.msra.mxu0 %v2085
    %2091 = vmatprep.subr.bf16.mxu0 0
    %2092 = vmatpush1.bf16.msra.mxu0 %v2086
    %2093 = vmatprep.subr.bf16.mxu0 0
    %2094 = vmatpush1.bf16.msra.mxu0 0
    %2095 = vmatprep.subr.bf16.mxu0 0
    %2096 = vmatpush1.bf16.msra.mxu0 0
    %2097 = vmatprep.subr.bf16.mxu0 0
    %2098 = vmatpush1.bf16.msra.mxu0 0
    %2099 = vmatprep.subr.bf16.mxu0 0
    %2100 = vmatpush1.bf16.msra.mxu0 0
    %2101 = vmatprep.subr.bf16.mxu0 0
    %2102 = vmatpush1.bf16.msra.mxu0 0
    %2103 = vmatprep.subr.bf16.mxu0 0
    %2104 = vmatpush1.bf16.msra.mxu0 0
    %2105 = vmatprep.subr.bf16.mxu0 0
    %2106 = vmatpush1.bf16.msra.mxu0 0
    %2107 = vmatprep.subr.bf16.mxu0 0
    %2108 = vmatpush1.bf16.msra.mxu0 0
    %2109 = vmatprep.subr.bf16.mxu0 0
    %2110 = vmatpush1.bf16.msra.mxu0 0
    %2111 = vmatprep.subr.bf16.mxu0 0
    %2112 = vmatpush1.bf16.msra.mxu0 0
    %2113 = vmatprep.subr.bf16.mxu0 0
    %2114 = vmatpush1.bf16.msra.mxu0 0
    %2115 = vmatprep.subr.bf16.mxu0 0
    %2116 = vmatpush1.bf16.msra.mxu0 0
    %2117 = vmatprep.subr.bf16.mxu0 0
    %2118 = vmatpush1.bf16.msra.mxu0 0
    %2119 = vmatprep.subr.bf16.mxu0 0
    %2120 = vmatpush1.bf16.msra.mxu0 0
    %2121 = vmatprep.mubr.bf16.mxu0 0
    %2122 = vmatmul.mubr.bf16.gmra.mrb[0].mxu0 %v1943
    %v2123 = vpop.f32.mrb[0].mxu0
    %v2124 = vadd.f32 %v2072, %v2123
    %v2125 = vpop.f32.mrb[0].mxu0
    %v2126 = vpop.f32.mrb[0].mxu0
    %v2127 = vpop.f32.mrb[0].mxu0
    %2128 = vdwg.mxu0
    %v2129 = vld [vmem:[#allocation7] sm:$0x1]
    %v2131 = vlaneseq
    %v2132 = vshrl.u32 %v2131, 7
    %v2133 = vsub.s32 0, %v2132
    %v2134 = vrot.slane %v2129, %v2133
    %v2136 = vadd.f32 %v2124, %v2134
    %v2137 = vtanh.pop %v2136
    %v2138 = vmul.f32 %v2137, %v225
    %v2139 = vld [vmem:[%s14] sm:$0xf]
    %v2140 = vld [vmem:[%s14 + $0x4] sm:$0xf]
    %v2141 = vld [vmem:[%s14 + $0x8] sm:$0xf]
    %v2142 = vld [vmem:[%s14 + $0xc] sm:$0xf]
    %v2143 = vld [vmem:[%s14 + $0x10] sm:$0xf]
    %v2144 = vld [vmem:[%s14 + $0x14] sm:$0xf]
    %v2145 = vld [vmem:[%s14 + $0x18] sm:$0xf]
    %v2146 = vld [vmem:[%s14 + $0x1c] sm:$0xf]
    %v2147 = vld [vmem:[%s14 + $0x20] sm:$0xf]
    %v2148 = vld [vmem:[%s14 + $0x24] sm:$0xf]
    %v2149 = vld [vmem:[%s14 + $0x28] sm:$0xf]
    %v2150 = vld [vmem:[%s14 + $0x2c] sm:$0xf]
    %v2151 = vld [vmem:[%s14 + $0x30] sm:$0xf]
    %v2152 = vld [vmem:[%s14 + $0x34] sm:$0xf]
    %v2153 = vld [vmem:[%s14 + $0x38] sm:$0xf]
    %v2154 = vld [vmem:[%s14 + $0x3c] sm:$0xf]
    %v2155 = vpack.c.bf16 %v2138, %v2138
    %v2156 = vld [vmem:[#allocation9] sm:$0x1]
    %v2158 = vlaneseq
    %v2159 = vshrl.u32 %v2158, 7
    %v2160 = vsub.s32 0, %v2159
    %v2161 = vrot.slane %v2156, %v2160
    %v2179 = vunpack.c.l.b16 %v2139
    %v2180 = vunpack.c.l.b16 %v2140
    %v2181 = vunpack.c.l.b16 %v2141
    %v2182 = vunpack.c.l.b16 %v2142
    %v2183 = vunpack.c.l.b16 %v2143
    %v2184 = vunpack.c.l.b16 %v2144
    %v2185 = vunpack.c.l.b16 %v2145
    %v2186 = vunpack.c.l.b16 %v2146
    %v2187 = vunpack.c.l.b16 %v2147
    %v2188 = vunpack.c.l.b16 %v2148
    %v2189 = vunpack.c.l.b16 %v2149
    %v2190 = vunpack.c.l.b16 %v2150
    %v2191 = vunpack.c.l.b16 %v2151
    %v2192 = vunpack.c.l.b16 %v2152
    %v2193 = vunpack.c.l.b16 %v2153
    %v2194 = vunpack.c.l.b16 %v2154
    %v2195 = vpack.c.b16 %v2180, %v2179
    %v2196 = vpack.c.b16 %v2182, %v2181
    %v2197 = vpack.c.b16 %v2184, %v2183
    %v2198 = vpack.c.b16 %v2186, %v2185
    %v2199 = vpack.c.b16 %v2188, %v2187
    %v2200 = vpack.c.b16 %v2190, %v2189
    %v2201 = vpack.c.b16 %v2192, %v2191
    %v2202 = vpack.c.b16 %v2194, %v2193
    %2211 = vmatprep.subr.bf16.mxu0 0
    %2212 = vmatpush1.bf16.msra.mxu0 %v2195
    %2213 = vmatprep.subr.bf16.mxu0 0
    %2214 = vmatpush1.bf16.msra.mxu0 %v2196
    %2215 = vmatprep.subr.bf16.mxu0 0
    %2216 = vmatpush1.bf16.msra.mxu0 %v2197
    %2217 = vmatprep.subr.bf16.mxu0 0
    %2218 = vmatpush1.bf16.msra.mxu0 %v2198
    %2219 = vmatprep.subr.bf16.mxu0 0
    %2220 = vmatpush1.bf16.msra.mxu0 %v2199
    %2221 = vmatprep.subr.bf16.mxu0 0
    %2222 = vmatpush1.bf16.msra.mxu0 %v2200
    %2223 = vmatprep.subr.bf16.mxu0 0
    %2224 = vmatpush1.bf16.msra.mxu0 %v2201
    %2225 = vmatprep.subr.bf16.mxu0 0
    %2226 = vmatpush1.bf16.msra.mxu0 %v2202
    %2227 = vmatprep.subr.bf16.mxu0 0
    %2228 = vmatpush1.bf16.msra.mxu0 0
    %2229 = vmatprep.subr.bf16.mxu0 0
    %2230 = vmatpush1.bf16.msra.mxu0 0
    %2231 = vmatprep.subr.bf16.mxu0 0
    %2232 = vmatpush1.bf16.msra.mxu0 0
    %2233 = vmatprep.subr.bf16.mxu0 0
    %2234 = vmatpush1.bf16.msra.mxu0 0
    %2235 = vmatprep.subr.bf16.mxu0 0
    %2236 = vmatpush1.bf16.msra.mxu0 0
    %2237 = vmatprep.subr.bf16.mxu0 0
    %2238 = vmatpush1.bf16.msra.mxu0 0
    %2239 = vmatprep.subr.bf16.mxu0 0
    %2240 = vmatpush1.bf16.msra.mxu0 0
    %2241 = vmatprep.subr.bf16.mxu0 0
    %2242 = vmatpush1.bf16.msra.mxu0 0
    %2243 = vmatprep.mubr.bf16.mxu0 0
    %2244 = vmatmul.mubr.bf16.gmra.mrb[0].mxu0 %v2155
    %v2245 = vpop.f32.mrb[0].mxu0
    %v2246 = vadd.f32 %v2161, %v2245
    %v2247 = vpop.f32.mrb[0].mxu0
    %v2248 = vpop.f32.mrb[0].mxu0
    %v2249 = vpop.f32.mrb[0].mxu0
    %2250 = vdwg.mxu0
    %2251 = vst [vmem:[%s16] sm:$0xff] %v2246
    // Predicated region
    $region86: #{deeper_lstm_forward.1} parent=1 // pred_check
      _
    $region87: #{deeper_lstm_forward.1} parent=1 // pred_check_branch
      %2253 = sbr.rel (0) target = $region89
    $region88: #{deeper_lstm_forward.1} parent=1 // pred_region
      _
    $region89: #{deeper_lstm_forward.1} parent=1 // pred_fallthru
      _
    // Predicated region
    $region90: #{deeper_lstm_forward.1} parent=1 // pred_check
      _
    $region91: #{deeper_lstm_forward.1} parent=1 // pred_check_branch
      %2255 = sbr.rel (0) target = $region93
    $region92: #{deeper_lstm_forward.1} parent=1 // pred_region
      _
    $region93: #{deeper_lstm_forward.1} parent=1 // pred_fallthru
      _
    %2256 = vsyncpa [#allocation3], 1
    %2257 = vsyncpa [#allocation5], 1
    %2258 = vsyncpa [#allocation8], 1

</llo_original>
